<compile_context>
chip_gen: v6e
topology: v6e:2x2x1
jax: 0.10.0
libtpu: 0.0.40
codegen_flags: <defaults>
</compile_context>

<pallas_src>
import jax
import jax.numpy as jnp
from jax.experimental import pallas as pl
from jax.experimental.pallas import tpu as pltpu


def han_kernel(a_ref, h_ref, wg_ref, bg_ref, w1_ref, b1_ref, w2_ref, wp_ref,
               pred_ref, z_ref):
    """Full HAN forward.

    a_ref : (M, N, N)   metapath adjacencies (A[m, dst, src])
    h_ref : (N, F_in)   node features
    wg_ref: (F_in, H)   GraphConv weight      bg_ref: (1, H)  GraphConv bias
    w1_ref: (H, S)      semantic-attn proj W  b1_ref: (1, S)  proj bias
    w2_ref: (1, S)      semantic-attn scoring vector (row layout)
    wp_ref: (H, O)      predict weight (no bias)
    pred_ref: (N, O)    output logits
    z_ref : (N, M*H)    semantic embeddings, node-major (reshaped to (N, M, H) outside)
    """
    M, N, _ = a_ref.shape
    H = wg_ref.shape[1]

    h = h_ref[...]                                                  # (N, F_in)
    A = a_ref[...]                                                  # (M, N, N)

    # --- symmetric degree normalization folded into A (DGL norm='both', degs clamped >=1) ---
    out_deg = jnp.maximum(jnp.sum(A, axis=1, keepdims=True), 1.0)   # (M, 1, N) out-deg(src)
    in_deg = jnp.maximum(jnp.sum(A, axis=2, keepdims=True), 1.0)    # (M, N, 1) in-deg(dst)
    An = A * jax.lax.rsqrt(out_deg) * jax.lax.rsqrt(in_deg)         # D_in^-1/2 A D_out^-1/2

    # --- ONE batched aggregation matmul across all metapaths ---
    agg = jnp.dot(An.reshape(M * N, N), h,
                  preferred_element_type=jnp.float32)               # (M*N, F_in)

    # --- batched shared-weight GraphConv + relu ---
    z_all = jnp.dot(agg, wg_ref[...],
                    preferred_element_type=jnp.float32) + bg_ref[...]
    z_all = jnp.maximum(z_all, 0.0)                                 # (M*N, H)

    # --- batched semantic-attention projection ---
    proj_all = jnp.tanh(jnp.dot(z_all, w1_ref[...],
                                preferred_element_type=jnp.float32) + b1_ref[...])  # (M*N, S)

    # --- semantic attention scores: mean over nodes first, then dot with w2 ---
    w2 = w2_ref[...]                                                # (1, S)
    scores = []
    for m in range(M):                                              # static unroll (M = 3)
        pm = jnp.mean(proj_all[m * N:(m + 1) * N], axis=0, keepdims=True)   # (1, S)
        scores.append(jnp.sum(pm * w2, axis=1, keepdims=True))              # (1, 1)

    # softmax over the M metapath scores (scalar math on (1,1) tiles)
    wmax = scores[0]
    for m in range(1, M):
        wmax = jnp.maximum(wmax, scores[m])
    es = [jnp.exp(s - wmax) for s in scores]
    denom = es[0]
    for m in range(1, M):
        denom = denom + es[m]
    inv = pl.reciprocal(denom, approx=True)                         # EUP, ~free

    # --- beta-weighted fusion + write z in the final node-major layout ---
    fused = jnp.zeros((N, H), jnp.float32)
    for m in range(M):
        z_m = z_all[m * N:(m + 1) * N]                              # (N, H) aligned slice
        z_ref[:, m * H:(m + 1) * H] = z_m
        fused = fused + (es[m] * inv) * z_m

    pred_ref[...] = jnp.dot(fused, wp_ref[...], preferred_element_type=jnp.float32)


@jax.jit
def han_forward(A, h, params):
    """Returns (logits (N, O), semantic_embeddings (N, M, H)) like HAN.forward."""
    M, N, _ = A.shape
    H = params["Wg"].shape[1]
    O = params["Wp"].shape[1]

    vmem = pl.BlockSpec(memory_space=pltpu.MemorySpace.VMEM)
    pred, z_flat = pl.pallas_call(
        han_kernel,
        out_shape=(
            jax.ShapeDtypeStruct((N, O), jnp.float32),
            jax.ShapeDtypeStruct((N, M * H), jnp.float32),
        ),
        in_specs=[vmem] * 8,
        out_specs=(vmem, vmem),
    )(A, h, params["Wg"], params["bg"], params["W1"], params["b1"],
      params["w2"], params["Wp"])

    # (N, M*H) -> (N, M, H): plain row-major reshape, no transpose kernel needed.
    return pred, z_flat.reshape(N, M, H)


def han_reference(A, h, params):
    """Pure-JAX reference (matches the PyTorch HAN forward with dropout p=0)."""
    hp = jax.lax.Precision.HIGHEST
    zs = []
    for m in range(A.shape[0]):
        Am = A[m]
        out_deg = jnp.maximum(Am.sum(axis=0), 1.0)
        in_deg = jnp.maximum(Am.sum(axis=1), 1.0)
        agg = jnp.dot(Am, h * jax.lax.rsqrt(out_deg)[:, None], precision=hp)
        agg = agg * jax.lax.rsqrt(in_deg)[:, None]
        zs.append(jax.nn.relu(jnp.dot(agg, params["Wg"], precision=hp) + params["bg"]))
    z = jnp.stack(zs, axis=1)                                            # (N, M, H)
    proj = jnp.tanh(jnp.dot(z, params["W1"], precision=hp) + params["b1"])
    s = jnp.dot(proj, params["w2"].T, precision=hp)                      # (N, M, 1)
    beta = jax.nn.softmax(s.mean(axis=0), axis=0)                        # (M, 1)
    fused = (beta[None, :, :] * z).sum(axis=1)                           # (N, H)
    return jnp.dot(fused, params["Wp"], precision=hp), z


def xavier_uniform(key, fan_in, fan_out):
    a = (6.0 / (fan_in + fan_out)) ** 0.5
    return jax.random.uniform(key, (fan_in, fan_out), jnp.float32, minval=-a, maxval=a)


def make_params(key, in_size, hidden_size, out_size, num_heads=1, attn_hidden=32):
    H = hidden_size * num_heads
    k = jax.random.split(key, 5)
    return {
        # GraphConv(in_size, hidden_size)
        "Wg": xavier_uniform(k[0], in_size, hidden_size),
        "bg": jnp.zeros((1, hidden_size), jnp.float32),
        # SemanticAttention: Linear(H, 32) -> Tanh -> Linear(32, 1, bias=False)
        "W1": xavier_uniform(k[1], H, attn_hidden),
        "b1": 0.01 * jax.random.normal(k[2], (1, attn_hidden), jnp.float32),
        "w2": xavier_uniform(k[3], attn_hidden, 1).T,   # stored as (1, attn_hidden)
        # predict: Linear(H, out_size, bias=False)
        "Wp": xavier_uniform(k[4], H, out_size),
    }


if __name__ == "__main__":
    key = jax.random.PRNGKey(0)
    N = 128          # nodes
    M = 3            # meta paths
    in_size = 32
    hidden_size = 32
    out_size = 8
    num_heads = 1

    k_a, k_h, k_p = jax.random.split(key, 3)
    # synthetic metapath-reachable graphs as dense adjacencies (dst, src)
    A = jax.random.bernoulli(k_a, 0.05, (M, N, N)).astype(jnp.float32)
    h = jax.random.normal(k_h, (N, in_size), jnp.float32)
    params = make_params(k_p, in_size, hidden_size, out_size, num_heads)

    logits, se = han_forward(A, h, params)
    jax.block_until_ready((logits, se))

    assert logits.shape == (N, out_size)
    assert se.shape == (N, M, hidden_size * num_heads)

    # numerical sanity check against a pure-JAX reference (loose tol: MXU precision modes)
    ref_logits, ref_se = han_reference(A, h, params)
    assert jnp.allclose(logits, ref_logits, rtol=5e-2, atol=5e-2), "logits mismatch"
    assert jnp.allclose(se, ref_se, rtol=5e-2, atol=5e-2), "embeddings mismatch"

    print("KERNEL_OK")
</pallas_src>

<mosaic_0001>
module attributes {stable_mosaic.version = 11 : i64} {
  func.func @han_kernel(%arg0: memref<3x128x128xf32, #tpu.memory_space<vmem>>, %arg1: memref<128x32xf32, #tpu.memory_space<vmem>>, %arg2: memref<32x32xf32, #tpu.memory_space<vmem>>, %arg3: memref<1x32xf32, #tpu.memory_space<vmem>>, %arg4: memref<32x32xf32, #tpu.memory_space<vmem>>, %arg5: memref<1x32xf32, #tpu.memory_space<vmem>>, %arg6: memref<1x32xf32, #tpu.memory_space<vmem>>, %arg7: memref<32x8xf32, #tpu.memory_space<vmem>>, %arg8: memref<128x8xf32, #tpu.memory_space<vmem>>, %arg9: memref<128x96xf32, #tpu.memory_space<vmem>>) attributes {dimension_semantics = [], scalar_prefetch = 0 : i64, scratch_operands = 0 : i64, tpu.core_type = #tpu.core_type<tc>} {
    %c0 = arith.constant 0 : index
    %c0_0 = arith.constant 0 : index
    %0 = vector.load %arg1[%c0, %c0_0] : memref<128x32xf32, #tpu.memory_space<vmem>>, vector<128x32xf32>
    %c0_1 = arith.constant 0 : index
    %c0_2 = arith.constant 0 : index
    %c0_3 = arith.constant 0 : index
    %1 = vector.load %arg0[%c0_1, %c0_2, %c0_3] : memref<3x128x128xf32, #tpu.memory_space<vmem>>, vector<3x128x128xf32>
    %cst = arith.constant dense<0.000000e+00> : vector<3x128xf32>
    %2 = vector.multi_reduction <add>, %1, %cst [1] : vector<3x128x128xf32> to vector<3x128xf32>
    %3 = vector.shape_cast %2 : vector<3x128xf32> to vector<3x1x128xf32>
    %cst_4 = arith.constant 1.000000e+00 : f32
    %4 = vector.broadcast %cst_4 : f32 to vector<3x1x128xf32>
    %5 = arith.maximumf %3, %4 : vector<3x1x128xf32>
    %cst_5 = arith.constant dense<0.000000e+00> : vector<3x128xf32>
    %6 = vector.multi_reduction <add>, %1, %cst_5 [2] : vector<3x128x128xf32> to vector<3x128xf32>
    %7 = vector.shape_cast %6 : vector<3x128xf32> to vector<3x128x1xf32>
    %cst_6 = arith.constant 1.000000e+00 : f32
    %8 = vector.broadcast %cst_6 : f32 to vector<3x128x1xf32>
    %9 = arith.maximumf %7, %8 : vector<3x128x1xf32>
    %10 = math.rsqrt %5 : vector<3x1x128xf32>
    %11 = vector.broadcast %10 : vector<3x1x128xf32> to vector<3x128x128xf32>
    %12 = arith.mulf %1, %11 : vector<3x128x128xf32>
    %13 = math.rsqrt %9 : vector<3x128x1xf32>
    %14 = vector.broadcast %13 : vector<3x128x1xf32> to vector<3x128x128xf32>
    %15 = arith.mulf %12, %14 : vector<3x128x128xf32>
    %16 = vector.shape_cast %15 : vector<3x128x128xf32> to vector<384x128xf32>
    %cst_7 = arith.constant dense<0.000000e+00> : vector<384x32xf32>
    %17 = tpu.matmul %16, %0, %cst_7 {dimension_numbers = #tpu.dot_dimension_numbers<[1], [0], [0], [1], [0, 0, 1, 1], [], []>} : vector<384x128xf32>, vector<128x32xf32>, vector<384x32xf32> -> vector<384x32xf32>
    %c0_8 = arith.constant 0 : index
    %c0_9 = arith.constant 0 : index
    %18 = vector.load %arg2[%c0_8, %c0_9] : memref<32x32xf32, #tpu.memory_space<vmem>>, vector<32x32xf32>
    %cst_10 = arith.constant dense<0.000000e+00> : vector<384x32xf32>
    %19 = tpu.matmul %17, %18, %cst_10 {dimension_numbers = #tpu.dot_dimension_numbers<[1], [0], [0], [1], [0, 0, 1, 1], [], []>} : vector<384x32xf32>, vector<32x32xf32>, vector<384x32xf32> -> vector<384x32xf32>
    %c0_11 = arith.constant 0 : index
    %c0_12 = arith.constant 0 : index
    %20 = vector.load %arg3[%c0_11, %c0_12] : memref<1x32xf32, #tpu.memory_space<vmem>>, vector<1x32xf32>
    %21 = vector.broadcast %20 : vector<1x32xf32> to vector<384x32xf32>
    %22 = arith.addf %19, %21 : vector<384x32xf32>
    %cst_13 = arith.constant 0.000000e+00 : f32
    %23 = vector.broadcast %cst_13 : f32 to vector<384x32xf32>
    %24 = arith.maximumf %22, %23 : vector<384x32xf32>
    %c0_14 = arith.constant 0 : index
    %c0_15 = arith.constant 0 : index
    %25 = vector.load %arg4[%c0_14, %c0_15] : memref<32x32xf32, #tpu.memory_space<vmem>>, vector<32x32xf32>
    %cst_16 = arith.constant dense<0.000000e+00> : vector<384x32xf32>
    %26 = tpu.matmul %24, %25, %cst_16 {dimension_numbers = #tpu.dot_dimension_numbers<[1], [0], [0], [1], [0, 0, 1, 1], [], []>} : vector<384x32xf32>, vector<32x32xf32>, vector<384x32xf32> -> vector<384x32xf32>
    %c0_17 = arith.constant 0 : index
    %c0_18 = arith.constant 0 : index
    %27 = vector.load %arg5[%c0_17, %c0_18] : memref<1x32xf32, #tpu.memory_space<vmem>>, vector<1x32xf32>
    %28 = vector.broadcast %27 : vector<1x32xf32> to vector<384x32xf32>
    %29 = arith.addf %26, %28 : vector<384x32xf32>
    %30 = math.tanh %29 : vector<384x32xf32>
    %c0_19 = arith.constant 0 : index
    %c0_20 = arith.constant 0 : index
    %31 = vector.load %arg6[%c0_19, %c0_20] : memref<1x32xf32, #tpu.memory_space<vmem>>, vector<1x32xf32>
    %32 = vector.extract_strided_slice %30 {offsets = [0, 0], sizes = [128, 32], strides = [1, 1]} : vector<384x32xf32> to vector<128x32xf32>
    %cst_21 = arith.constant dense<0.000000e+00> : vector<32xf32>
    %33 = vector.multi_reduction <add>, %32, %cst_21 [0] : vector<128x32xf32> to vector<32xf32>
    %34 = vector.shape_cast %33 : vector<32xf32> to vector<1x32xf32>
    %cst_22 = arith.constant 1.280000e+02 : f32
    %35 = vector.broadcast %cst_22 : f32 to vector<1x32xf32>
    %36 = arith.divf %34, %35 : vector<1x32xf32>
    %37 = arith.mulf %36, %31 : vector<1x32xf32>
    %cst_23 = arith.constant dense<0.000000e+00> : vector<1xf32>
    %38 = vector.multi_reduction <add>, %37, %cst_23 [1] : vector<1x32xf32> to vector<1xf32>
    %39 = vector.shape_cast %38 : vector<1xf32> to vector<1x1xf32>
    %40 = vector.extract_strided_slice %30 {offsets = [128, 0], sizes = [128, 32], strides = [1, 1]} : vector<384x32xf32> to vector<128x32xf32>
    %cst_24 = arith.constant dense<0.000000e+00> : vector<32xf32>
    %41 = vector.multi_reduction <add>, %40, %cst_24 [0] : vector<128x32xf32> to vector<32xf32>
    %42 = vector.shape_cast %41 : vector<32xf32> to vector<1x32xf32>
    %cst_25 = arith.constant 1.280000e+02 : f32
    %43 = vector.broadcast %cst_25 : f32 to vector<1x32xf32>
    %44 = arith.divf %42, %43 : vector<1x32xf32>
    %45 = arith.mulf %44, %31 : vector<1x32xf32>
    %cst_26 = arith.constant dense<0.000000e+00> : vector<1xf32>
    %46 = vector.multi_reduction <add>, %45, %cst_26 [1] : vector<1x32xf32> to vector<1xf32>
    %47 = vector.shape_cast %46 : vector<1xf32> to vector<1x1xf32>
    %48 = vector.extract_strided_slice %30 {offsets = [256, 0], sizes = [128, 32], strides = [1, 1]} : vector<384x32xf32> to vector<128x32xf32>
    %cst_27 = arith.constant dense<0.000000e+00> : vector<32xf32>
    %49 = vector.multi_reduction <add>, %48, %cst_27 [0] : vector<128x32xf32> to vector<32xf32>
    %50 = vector.shape_cast %49 : vector<32xf32> to vector<1x32xf32>
    %cst_28 = arith.constant 1.280000e+02 : f32
    %51 = vector.broadcast %cst_28 : f32 to vector<1x32xf32>
    %52 = arith.divf %50, %51 : vector<1x32xf32>
    %53 = arith.mulf %52, %31 : vector<1x32xf32>
    %cst_29 = arith.constant dense<0.000000e+00> : vector<1xf32>
    %54 = vector.multi_reduction <add>, %53, %cst_29 [1] : vector<1x32xf32> to vector<1xf32>
    %55 = vector.shape_cast %54 : vector<1xf32> to vector<1x1xf32>
    %56 = arith.maximumf %39, %47 : vector<1x1xf32>
    %57 = arith.maximumf %56, %55 : vector<1x1xf32>
    %58 = arith.subf %39, %57 : vector<1x1xf32>
    %59 = math.exp %58 : vector<1x1xf32>
    %60 = arith.subf %47, %57 : vector<1x1xf32>
    %61 = math.exp %60 : vector<1x1xf32>
    %62 = arith.subf %55, %57 : vector<1x1xf32>
    %63 = math.exp %62 : vector<1x1xf32>
    %64 = arith.addf %59, %61 : vector<1x1xf32>
    %65 = arith.addf %64, %63 : vector<1x1xf32>
    %66 = tpu.reciprocal %65 {approx = true} : vector<1x1xf32> -> vector<1x1xf32>
    %cst_30 = arith.constant 0.000000e+00 : f32
    %67 = vector.broadcast %cst_30 : f32 to vector<128x32xf32>
    %68 = vector.extract_strided_slice %24 {offsets = [0, 0], sizes = [128, 32], strides = [1, 1]} : vector<384x32xf32> to vector<128x32xf32>
    %c0_31 = arith.constant 0 : index
    %c0_32 = arith.constant 0 : index
    %69 = vector.load %arg9[%c0_31, %c0_32] : memref<128x96xf32, #tpu.memory_space<vmem>>, vector<128x32xf32>
    tpu.vector_store %arg9[%c0_31, %c0_32], %68 {strides = array<i32>} : memref<128x96xf32, #tpu.memory_space<vmem>>, vector<128x32xf32>,
    %70 = arith.mulf %59, %66 : vector<1x1xf32>
    %71 = vector.broadcast %70 : vector<1x1xf32> to vector<128x32xf32>
    %72 = arith.mulf %71, %68 : vector<128x32xf32>
    %73 = arith.addf %67, %72 : vector<128x32xf32>
    %74 = vector.extract_strided_slice %24 {offsets = [128, 0], sizes = [128, 32], strides = [1, 1]} : vector<384x32xf32> to vector<128x32xf32>
    %c0_33 = arith.constant 0 : index
    %c32 = arith.constant 32 : index
    %75 = vector.load %arg9[%c0_33, %c32] : memref<128x96xf32, #tpu.memory_space<vmem>>, vector<128x32xf32>
    tpu.vector_store %arg9[%c0_33, %c32], %74 {strides = array<i32>} : memref<128x96xf32, #tpu.memory_space<vmem>>, vector<128x32xf32>,
    %76 = arith.mulf %61, %66 : vector<1x1xf32>
    %77 = vector.broadcast %76 : vector<1x1xf32> to vector<128x32xf32>
    %78 = arith.mulf %77, %74 : vector<128x32xf32>
    %79 = arith.addf %73, %78 : vector<128x32xf32>
    %80 = vector.extract_strided_slice %24 {offsets = [256, 0], sizes = [128, 32], strides = [1, 1]} : vector<384x32xf32> to vector<128x32xf32>
    %c0_34 = arith.constant 0 : index
    %c64 = arith.constant 64 : index
    %81 = vector.load %arg9[%c0_34, %c64] : memref<128x96xf32, #tpu.memory_space<vmem>>, vector<128x32xf32>
    tpu.vector_store %arg9[%c0_34, %c64], %80 {strides = array<i32>} : memref<128x96xf32, #tpu.memory_space<vmem>>, vector<128x32xf32>,
    %82 = arith.mulf %63, %66 : vector<1x1xf32>
    %83 = vector.broadcast %82 : vector<1x1xf32> to vector<128x32xf32>
    %84 = arith.mulf %83, %80 : vector<128x32xf32>
    %85 = arith.addf %79, %84 : vector<128x32xf32>
    %c0_35 = arith.constant 0 : index
    %c0_36 = arith.constant 0 : index
    %86 = vector.load %arg7[%c0_35, %c0_36] : memref<32x8xf32, #tpu.memory_space<vmem>>, vector<32x8xf32>
    %cst_37 = arith.constant dense<0.000000e+00> : vector<128x8xf32>
    %87 = tpu.matmul %85, %86, %cst_37 {dimension_numbers = #tpu.dot_dimension_numbers<[1], [0], [0], [1], [0, 0, 1, 1], [], []>} : vector<128x32xf32>, vector<32x8xf32>, vector<128x8xf32> -> vector<128x8xf32>
    %c0_38 = arith.constant 0 : index
    %c0_39 = arith.constant 0 : index
    %88 = vector.load %arg8[%c0_38, %c0_39] : memref<128x8xf32, #tpu.memory_space<vmem>>, vector<128x8xf32>
    tpu.vector_store %arg8[%c0_38, %c0_39], %87 {strides = array<i32>} : memref<128x8xf32, #tpu.memory_space<vmem>>, vector<128x8xf32>,
    return
  }
}

</mosaic_0001>

<llo_original>
// kernel: han_forward.1
$region0: #{han_forward.1}
  #allocation0 [shape = 'u32[]', space=smem, size = 0x4, offset = 0x4, fixed_abs, tag = 'smem constant byte address 0x4 - core index']
  #allocation1 [shape = 'u32[144,128]{1,0:T(1,128)}', space=vmem, size = 0x12000, scoped, tag = 'internal scratch']
  %s0 = inlined_call_operand.hbm [shape: f32[3,128,128], index: 0, kind: input, shape index: {}]
  %s1 = inlined_call_operand.vmem [shape: f32[128,32], index: 1, kind: input, shape index: {}]
  %s2 = inlined_call_operand.vmem [shape: f32[32,32], index: 2, kind: input, shape index: {}]
  %s3 = inlined_call_operand.vmem [shape: f32[1,32], index: 3, kind: input, shape index: {}]
  %s4 = inlined_call_operand.vmem [shape: f32[32,32], index: 4, kind: input, shape index: {}]
  %s5 = inlined_call_operand.vmem [shape: f32[1,32], index: 5, kind: input, shape index: {}]
  %s6 = inlined_call_operand.vmem [shape: f32[1,32], index: 6, kind: input, shape index: {}]
  %s7 = inlined_call_operand.vmem [shape: f32[32,8], index: 7, kind: input, shape index: {}]
  %s8 = inlined_call_operand.vmem [shape: f32[128,8], index: 8, kind: output, shape index: {0}]
  %s9 = inlined_call_operand.vmem [shape: f32[128,96], index: 9, kind: output, shape index: {1}]
  %10 = xla_tuple %s8, %s9
  %s11 = sld [smem:[#allocation0]]
  $region54: #{han_forward.1} parent=0
    _
  %s13 = ssub.s32 1, %s11
  %s14 = scalar_select 0, %s13, %s11
  $region1: #{han_forward.1} parent=0
    #allocation2 [shape = 'u8[196608]{0}', space=vmem, size = 0x30000, scoped, tag = 'input window, operand 0, single buffered']
    #allocation3 [shape = 's32[1]{0}', space=sflag, size = 0x4, scoped, tag = 'scoped memory for han_forward.1']
    %15 = vsyncpa [#allocation3], 0
    // Predicated region
    $region2: #{han_forward.1} parent=1 // pred_check
      _
    $region3: #{han_forward.1} parent=1 // pred_check_branch
      %17 = sbr.rel (0) target = $region5
    $region4: #{han_forward.1} parent=1 // pred_region
      %s19 = ssub.s32 6144, 6144
      %20 = vsyncadd [#allocation3], %s19
      %s21 = sshll.u32 [#allocation2], 4
      %s22 = int_to_ptr.vmem [resolvable:$true] %s21
      %27 = dma.hbm_to_vmem [thread:$0]  %s0, 6144, %s22, [#allocation3], 128, 128, 8
    $region5: #{han_forward.1} parent=1 // pred_fallthru
      _
    // Predicated region
    $region6: #{han_forward.1} parent=1 // pred_check
      _
    $region7: #{han_forward.1} parent=1 // pred_check_branch
      %29 = sbr.rel (0) target = $region9
    $region8: #{han_forward.1} parent=1 // pred_region
      _
    $region9: #{han_forward.1} parent=1 // pred_fallthru
      _
    // Predicated region
    $region10: #{han_forward.1} parent=1 // pred_check
      _
    $region11: #{han_forward.1} parent=1 // pred_check_branch
      %31 = sbr.rel (0) target = $region13
    $region12: #{han_forward.1} parent=1 // pred_region
      _
    $region13: #{han_forward.1} parent=1 // pred_fallthru
      _
    // Predicated region
    $region14: #{han_forward.1} parent=1 // pred_check
      _
    $region15: #{han_forward.1} parent=1 // pred_check_branch
      %33 = sbr.rel (0) target = $region17
    $region16: #{han_forward.1} parent=1 // pred_region
      _
    $region17: #{han_forward.1} parent=1 // pred_fallthru
      _
    // Predicated region
    $region18: #{han_forward.1} parent=1 // pred_check
      _
    $region19: #{han_forward.1} parent=1 // pred_check_branch
      %35 = sbr.rel (0) target = $region21
    $region20: #{han_forward.1} parent=1 // pred_region
      _
    $region21: #{han_forward.1} parent=1 // pred_fallthru
      _
    // Predicated region
    $region22: #{han_forward.1} parent=1 // pred_check
      _
    $region23: #{han_forward.1} parent=1 // pred_check_branch
      %37 = sbr.rel (0) target = $region25
    $region24: #{han_forward.1} parent=1 // pred_region
      _
    $region25: #{han_forward.1} parent=1 // pred_fallthru
      _
    // Predicated region
    $region26: #{han_forward.1} parent=1 // pred_check
      _
    $region27: #{han_forward.1} parent=1 // pred_check_branch
      %39 = sbr.rel (0) target = $region29
    $region28: #{han_forward.1} parent=1 // pred_region
      _
    $region29: #{han_forward.1} parent=1 // pred_fallthru
      _
    // Predicated region
    $region30: #{han_forward.1} parent=1 // pred_check
      _
    $region31: #{han_forward.1} parent=1 // pred_check_branch
      %41 = sbr.rel (0) target = $region33
    $region32: #{han_forward.1} parent=1 // pred_region
      _
    $region33: #{han_forward.1} parent=1 // pred_fallthru
      _
    // Predicated region
    $region34: #{han_forward.1} parent=1 // pred_check
      _
    $region35: #{han_forward.1} parent=1 // pred_check_branch
      %43 = sbr.rel (0) target = $region37
    $region36: #{han_forward.1} parent=1 // pred_region
      %44 = dma.done [#allocation3], 6144
    $region37: #{han_forward.1} parent=1 // pred_fallthru
      _
    %v45 = vld [vmem:[%s1] sm:$0xff]
    %v46 = vld [vmem:[%s1 + $0x8] sm:$0xff]
    %v47 = vld [vmem:[%s1 + $0x10] sm:$0xff]
    %v48 = vld [vmem:[%s1 + $0x18] sm:$0xff]
    %v49 = vld [vmem:[%s1 + $0x20] sm:$0xff]
    %v50 = vld [vmem:[%s1 + $0x28] sm:$0xff]
    %v51 = vld [vmem:[%s1 + $0x30] sm:$0xff]
    %v52 = vld [vmem:[%s1 + $0x38] sm:$0xff]
    %v53 = vld [vmem:[%s1 + $0x40] sm:$0xff]
    %v54 = vld [vmem:[%s1 + $0x48] sm:$0xff]
    %v55 = vld [vmem:[%s1 + $0x50] sm:$0xff]
    %v56 = vld [vmem:[%s1 + $0x58] sm:$0xff]
    %v57 = vld [vmem:[%s1 + $0x60] sm:$0xff]
    %v58 = vld [vmem:[%s1 + $0x68] sm:$0xff]
    %v59 = vld [vmem:[%s1 + $0x70] sm:$0xff]
    %v60 = vld [vmem:[%s1 + $0x78] sm:$0xff]
    %v61 = vld [vmem:[#allocation2] sm:$0xff]
    %v62 = vld [vmem:[#allocation2 + $0x8] sm:$0xff]
    %v63 = vld [vmem:[#allocation2 + $0x10] sm:$0xff]
    %v64 = vld [vmem:[#allocation2 + $0x18] sm:$0xff]
    %v65 = vld [vmem:[#allocation2 + $0x20] sm:$0xff]
    %v66 = vld [vmem:[#allocation2 + $0x28] sm:$0xff]
    %v67 = vld [vmem:[#allocation2 + $0x30] sm:$0xff]
    %v68 = vld [vmem:[#allocation2 + $0x38] sm:$0xff]
    %v69 = vld [vmem:[#allocation2 + $0x40] sm:$0xff]
    %v70 = vld [vmem:[#allocation2 + $0x48] sm:$0xff]
    %v71 = vld [vmem:[#allocation2 + $0x50] sm:$0xff]
    %v72 = vld [vmem:[#allocation2 + $0x58] sm:$0xff]
    %v73 = vld [vmem:[#allocation2 + $0x60] sm:$0xff]
    %v74 = vld [vmem:[#allocation2 + $0x68] sm:$0xff]
    %v75 = vld [vmem:[#allocation2 + $0x70] sm:$0xff]
    %v76 = vld [vmem:[#allocation2 + $0x78] sm:$0xff]
    %v77 = vld [vmem:[#allocation2 + $0x80] sm:$0xff]
    %v78 = vld [vmem:[#allocation2 + $0x88] sm:$0xff]
    %v79 = vld [vmem:[#allocation2 + $0x90] sm:$0xff]
    %v80 = vld [vmem:[#allocation2 + $0x98] sm:$0xff]
    %v81 = vld [vmem:[#allocation2 + $0xa0] sm:$0xff]
    %v82 = vld [vmem:[#allocation2 + $0xa8] sm:$0xff]
    %v83 = vld [vmem:[#allocation2 + $0xb0] sm:$0xff]
    %v84 = vld [vmem:[#allocation2 + $0xb8] sm:$0xff]
    %v85 = vld [vmem:[#allocation2 + $0xc0] sm:$0xff]
    %v86 = vld [vmem:[#allocation2 + $0xc8] sm:$0xff]
    %v87 = vld [vmem:[#allocation2 + $0xd0] sm:$0xff]
    %v88 = vld [vmem:[#allocation2 + $0xd8] sm:$0xff]
    %v89 = vld [vmem:[#allocation2 + $0xe0] sm:$0xff]
    %v90 = vld [vmem:[#allocation2 + $0xe8] sm:$0xff]
    %v91 = vld [vmem:[#allocation2 + $0xf0] sm:$0xff]
    %v92 = vld [vmem:[#allocation2 + $0xf8] sm:$0xff]
    %v93 = vld [vmem:[#allocation2 + $0x100] sm:$0xff]
    %v94 = vld [vmem:[#allocation2 + $0x108] sm:$0xff]
    %v95 = vld [vmem:[#allocation2 + $0x110] sm:$0xff]
    %v96 = vld [vmem:[#allocation2 + $0x118] sm:$0xff]
    %v97 = vld [vmem:[#allocation2 + $0x120] sm:$0xff]
    %v98 = vld [vmem:[#allocation2 + $0x128] sm:$0xff]
    %v99 = vld [vmem:[#allocation2 + $0x130] sm:$0xff]
    %v100 = vld [vmem:[#allocation2 + $0x138] sm:$0xff]
    %v101 = vld [vmem:[#allocation2 + $0x140] sm:$0xff]
    %v102 = vld [vmem:[#allocation2 + $0x148] sm:$0xff]
    %v103 = vld [vmem:[#allocation2 + $0x150] sm:$0xff]
    %v104 = vld [vmem:[#allocation2 + $0x158] sm:$0xff]
    %v105 = vld [vmem:[#allocation2 + $0x160] sm:$0xff]
    %v106 = vld [vmem:[#allocation2 + $0x168] sm:$0xff]
    %v107 = vld [vmem:[#allocation2 + $0x170] sm:$0xff]
    %v108 = vld [vmem:[#allocation2 + $0x178] sm:$0xff]
    %v109 = vadd.f32 %v61, %v62
    %v110 = vadd.f32 %v109, %v63
    %v111 = vadd.f32 %v110, %v64
    %v112 = vadd.f32 %v111, %v65
    %v113 = vadd.f32 %v112, %v66
    %v114 = vadd.f32 %v113, %v67
    %v115 = vadd.f32 %v114, %v68
    %v116 = vadd.f32 %v115, %v69
    %v117 = vadd.f32 %v116, %v70
    %v118 = vadd.f32 %v117, %v71
    %v119 = vadd.f32 %v118, %v72
    %v120 = vadd.f32 %v119, %v73
    %v121 = vadd.f32 %v120, %v74
    %v122 = vadd.f32 %v121, %v75
    %v123 = vadd.f32 %v122, %v76
    %v124 = vrot.slane %v123, 4
    %v125 = vadd.f32 %v123, %v124
    %v126 = vrot.slane %v125, 2
    %v127 = vadd.f32 %v125, %v126
    %v128 = vrot.slane %v127, 1
    %v129 = vadd.f32 %v127, %v128
    %v130 = vadd.f32 %v77, %v78
    %v131 = vadd.f32 %v130, %v79
    %v132 = vadd.f32 %v131, %v80
    %v133 = vadd.f32 %v132, %v81
    %v134 = vadd.f32 %v133, %v82
    %v135 = vadd.f32 %v134, %v83
    %v136 = vadd.f32 %v135, %v84
    %v137 = vadd.f32 %v136, %v85
    %v138 = vadd.f32 %v137, %v86
    %v139 = vadd.f32 %v138, %v87
    %v140 = vadd.f32 %v139, %v88
    %v141 = vadd.f32 %v140, %v89
    %v142 = vadd.f32 %v141, %v90
    %v143 = vadd.f32 %v142, %v91
    %v144 = vadd.f32 %v143, %v92
    %v145 = vrot.slane %v144, 4
    %v146 = vadd.f32 %v144, %v145
    %v147 = vrot.slane %v146, 2
    %v148 = vadd.f32 %v146, %v147
    %v149 = vrot.slane %v148, 1
    %v150 = vadd.f32 %v148, %v149
    %v151 = vadd.f32 %v93, %v94
    %v152 = vadd.f32 %v151, %v95
    %v153 = vadd.f32 %v152, %v96
    %v154 = vadd.f32 %v153, %v97
    %v155 = vadd.f32 %v154, %v98
    %v156 = vadd.f32 %v155, %v99
    %v157 = vadd.f32 %v156, %v100
    %v158 = vadd.f32 %v157, %v101
    %v159 = vadd.f32 %v158, %v102
    %v160 = vadd.f32 %v159, %v103
    %v161 = vadd.f32 %v160, %v104
    %v162 = vadd.f32 %v161, %v105
    %v163 = vadd.f32 %v162, %v106
    %v164 = vadd.f32 %v163, %v107
    %v165 = vadd.f32 %v164, %v108
    %v166 = vrot.slane %v165, 4
    %v167 = vadd.f32 %v165, %v166
    %v168 = vrot.slane %v167, 2
    %v169 = vadd.f32 %v167, %v168
    %v170 = vrot.slane %v169, 1
    %v171 = vadd.f32 %v169, %v170
    %v172 = vmax.f32 %v129, 1.0
    %v173 = vmax.f32 %v150, 1.0
    %v174 = vmax.f32 %v171, 1.0
    %175 = vadd.xlane.f32.xlu0 %v61
    %v176 = vpop.xlane.xlu0 %175
    %177 = vadd.xlane.f32.xlu0 %v62
    %v178 = vpop.xlane.xlu0 %177
    %179 = vadd.xlane.f32.xlu0 %v63
    %v180 = vpop.xlane.xlu0 %179
    %181 = vadd.xlane.f32.xlu0 %v64
    %v182 = vpop.xlane.xlu0 %181
    %183 = vadd.xlane.f32.xlu0 %v65
    %v184 = vpop.xlane.xlu0 %183
    %185 = vadd.xlane.f32.xlu0 %v66
    %v186 = vpop.xlane.xlu0 %185
    %187 = vadd.xlane.f32.xlu0 %v67
    %v188 = vpop.xlane.xlu0 %187
    %189 = vadd.xlane.f32.xlu0 %v68
    %v190 = vpop.xlane.xlu0 %189
    %191 = vadd.xlane.f32.xlu0 %v69
    %v192 = vpop.xlane.xlu0 %191
    %193 = vadd.xlane.f32.xlu0 %v70
    %v194 = vpop.xlane.xlu0 %193
    %195 = vadd.xlane.f32.xlu0 %v71
    %v196 = vpop.xlane.xlu0 %195
    %197 = vadd.xlane.f32.xlu0 %v72
    %v198 = vpop.xlane.xlu0 %197
    %199 = vadd.xlane.f32.xlu0 %v73
    %v200 = vpop.xlane.xlu0 %199
    %201 = vadd.xlane.f32.xlu0 %v74
    %v202 = vpop.xlane.xlu0 %201
    %203 = vadd.xlane.f32.xlu0 %v75
    %v204 = vpop.xlane.xlu0 %203
    %205 = vadd.xlane.f32.xlu0 %v76
    %v206 = vpop.xlane.xlu0 %205
    %207 = vadd.xlane.f32.xlu0 %v77
    %v208 = vpop.xlane.xlu0 %207
    %209 = vadd.xlane.f32.xlu0 %v78
    %v210 = vpop.xlane.xlu0 %209
    %211 = vadd.xlane.f32.xlu0 %v79
    %v212 = vpop.xlane.xlu0 %211
    %213 = vadd.xlane.f32.xlu0 %v80
    %v214 = vpop.xlane.xlu0 %213
    %215 = vadd.xlane.f32.xlu0 %v81
    %v216 = vpop.xlane.xlu0 %215
    %217 = vadd.xlane.f32.xlu0 %v82
    %v218 = vpop.xlane.xlu0 %217
    %219 = vadd.xlane.f32.xlu0 %v83
    %v220 = vpop.xlane.xlu0 %219
    %221 = vadd.xlane.f32.xlu0 %v84
    %v222 = vpop.xlane.xlu0 %221
    %223 = vadd.xlane.f32.xlu0 %v85
    %v224 = vpop.xlane.xlu0 %223
    %225 = vadd.xlane.f32.xlu0 %v86
    %v226 = vpop.xlane.xlu0 %225
    %227 = vadd.xlane.f32.xlu0 %v87
    %v228 = vpop.xlane.xlu0 %227
    %229 = vadd.xlane.f32.xlu0 %v88
    %v230 = vpop.xlane.xlu0 %229
    %231 = vadd.xlane.f32.xlu0 %v89
    %v232 = vpop.xlane.xlu0 %231
    %233 = vadd.xlane.f32.xlu0 %v90
    %v234 = vpop.xlane.xlu0 %233
    %235 = vadd.xlane.f32.xlu0 %v91
    %v236 = vpop.xlane.xlu0 %235
    %237 = vadd.xlane.f32.xlu0 %v92
    %v238 = vpop.xlane.xlu0 %237
    %239 = vadd.xlane.f32.xlu0 %v93
    %v240 = vpop.xlane.xlu0 %239
    %241 = vadd.xlane.f32.xlu0 %v94
    %v242 = vpop.xlane.xlu0 %241
    %243 = vadd.xlane.f32.xlu0 %v95
    %v244 = vpop.xlane.xlu0 %243
    %245 = vadd.xlane.f32.xlu0 %v96
    %v246 = vpop.xlane.xlu0 %245
    %247 = vadd.xlane.f32.xlu0 %v97
    %v248 = vpop.xlane.xlu0 %247
    %249 = vadd.xlane.f32.xlu0 %v98
    %v250 = vpop.xlane.xlu0 %249
    %251 = vadd.xlane.f32.xlu0 %v99
    %v252 = vpop.xlane.xlu0 %251
    %253 = vadd.xlane.f32.xlu0 %v100
    %v254 = vpop.xlane.xlu0 %253
    %255 = vadd.xlane.f32.xlu0 %v101
    %v256 = vpop.xlane.xlu0 %255
    %257 = vadd.xlane.f32.xlu0 %v102
    %v258 = vpop.xlane.xlu0 %257
    %259 = vadd.xlane.f32.xlu0 %v103
    %v260 = vpop.xlane.xlu0 %259
    %261 = vadd.xlane.f32.xlu0 %v104
    %v262 = vpop.xlane.xlu0 %261
    %263 = vadd.xlane.f32.xlu0 %v105
    %v264 = vpop.xlane.xlu0 %263
    %265 = vadd.xlane.f32.xlu0 %v106
    %v266 = vpop.xlane.xlu0 %265
    %267 = vadd.xlane.f32.xlu0 %v107
    %v268 = vpop.xlane.xlu0 %267
    %269 = vadd.xlane.f32.xlu0 %v108
    %v270 = vpop.xlane.xlu0 %269
    %v271 = vmax.f32 %v176, 1.0
    %v272 = vmax.f32 %v178, 1.0
    %v273 = vmax.f32 %v180, 1.0
    %v274 = vmax.f32 %v182, 1.0
    %v275 = vmax.f32 %v184, 1.0
    %v276 = vmax.f32 %v186, 1.0
    %v277 = vmax.f32 %v188, 1.0
    %v278 = vmax.f32 %v190, 1.0
    %v279 = vmax.f32 %v192, 1.0
    %v280 = vmax.f32 %v194, 1.0
    %v281 = vmax.f32 %v196, 1.0
    %v282 = vmax.f32 %v198, 1.0
    %v283 = vmax.f32 %v200, 1.0
    %v284 = vmax.f32 %v202, 1.0
    %v285 = vmax.f32 %v204, 1.0
    %v286 = vmax.f32 %v206, 1.0
    %v287 = vmax.f32 %v208, 1.0
    %v288 = vmax.f32 %v210, 1.0
    %v289 = vmax.f32 %v212, 1.0
    %v290 = vmax.f32 %v214, 1.0
    %v291 = vmax.f32 %v216, 1.0
    %v292 = vmax.f32 %v218, 1.0
    %v293 = vmax.f32 %v220, 1.0
    %v294 = vmax.f32 %v222, 1.0
    %v295 = vmax.f32 %v224, 1.0
    %v296 = vmax.f32 %v226, 1.0
    %v297 = vmax.f32 %v228, 1.0
    %v298 = vmax.f32 %v230, 1.0
    %v299 = vmax.f32 %v232, 1.0
    %v300 = vmax.f32 %v234, 1.0
    %v301 = vmax.f32 %v236, 1.0
    %v302 = vmax.f32 %v238, 1.0
    %v303 = vmax.f32 %v240, 1.0
    %v304 = vmax.f32 %v242, 1.0
    %v305 = vmax.f32 %v244, 1.0
    %v306 = vmax.f32 %v246, 1.0
    %v307 = vmax.f32 %v248, 1.0
    %v308 = vmax.f32 %v250, 1.0
    %v309 = vmax.f32 %v252, 1.0
    %v310 = vmax.f32 %v254, 1.0
    %v311 = vmax.f32 %v256, 1.0
    %v312 = vmax.f32 %v258, 1.0
    %v313 = vmax.f32 %v260, 1.0
    %v314 = vmax.f32 %v262, 1.0
    %v315 = vmax.f32 %v264, 1.0
    %v316 = vmax.f32 %v266, 1.0
    %v317 = vmax.f32 %v268, 1.0
    %v318 = vmax.f32 %v270, 1.0
    %v319 = vrsqrt.pop %v172
    %v320 = vrsqrt.pop %v173
    %v321 = vrsqrt.pop %v174
    %v322 = vmul.f32 %v61, %v319
    %v323 = vmul.f32 %v62, %v319
    %v324 = vmul.f32 %v63, %v319
    %v325 = vmul.f32 %v64, %v319
    %v326 = vmul.f32 %v65, %v319
    %v327 = vmul.f32 %v66, %v319
    %v328 = vmul.f32 %v67, %v319
    %v329 = vmul.f32 %v68, %v319
    %v330 = vmul.f32 %v69, %v319
    %v331 = vmul.f32 %v70, %v319
    %v332 = vmul.f32 %v71, %v319
    %v333 = vmul.f32 %v72, %v319
    %v334 = vmul.f32 %v73, %v319
    %v335 = vmul.f32 %v74, %v319
    %v336 = vmul.f32 %v75, %v319
    %v337 = vmul.f32 %v76, %v319
    %v338 = vmul.f32 %v77, %v320
    %v339 = vmul.f32 %v78, %v320
    %v340 = vmul.f32 %v79, %v320
    %v341 = vmul.f32 %v80, %v320
    %v342 = vmul.f32 %v81, %v320
    %v343 = vmul.f32 %v82, %v320
    %v344 = vmul.f32 %v83, %v320
    %v345 = vmul.f32 %v84, %v320
    %v346 = vmul.f32 %v85, %v320
    %v347 = vmul.f32 %v86, %v320
    %v348 = vmul.f32 %v87, %v320
    %v349 = vmul.f32 %v88, %v320
    %v350 = vmul.f32 %v89, %v320
    %v351 = vmul.f32 %v90, %v320
    %v352 = vmul.f32 %v91, %v320
    %v353 = vmul.f32 %v92, %v320
    %v354 = vmul.f32 %v93, %v321
    %v355 = vmul.f32 %v94, %v321
    %v356 = vmul.f32 %v95, %v321
    %v357 = vmul.f32 %v96, %v321
    %v358 = vmul.f32 %v97, %v321
    %v359 = vmul.f32 %v98, %v321
    %v360 = vmul.f32 %v99, %v321
    %v361 = vmul.f32 %v100, %v321
    %v362 = vmul.f32 %v101, %v321
    %v363 = vmul.f32 %v102, %v321
    %v364 = vmul.f32 %v103, %v321
    %v365 = vmul.f32 %v104, %v321
    %v366 = vmul.f32 %v105, %v321
    %v367 = vmul.f32 %v106, %v321
    %v368 = vmul.f32 %v107, %v321
    %v369 = vmul.f32 %v108, %v321
    %v370 = vrsqrt.pop %v271
    %v371 = vrsqrt.pop %v272
    %v372 = vrsqrt.pop %v273
    %v373 = vrsqrt.pop %v274
    %v374 = vrsqrt.pop %v275
    %v375 = vrsqrt.pop %v276
    %v376 = vrsqrt.pop %v277
    %v377 = vrsqrt.pop %v278
    %v378 = vrsqrt.pop %v279
    %v379 = vrsqrt.pop %v280
    %v380 = vrsqrt.pop %v281
    %v381 = vrsqrt.pop %v282
    %v382 = vrsqrt.pop %v283
    %v383 = vrsqrt.pop %v284
    %v384 = vrsqrt.pop %v285
    %v385 = vrsqrt.pop %v286
    %v386 = vrsqrt.pop %v287
    %v387 = vrsqrt.pop %v288
    %v388 = vrsqrt.pop %v289
    %v389 = vrsqrt.pop %v290
    %v390 = vrsqrt.pop %v291
    %v391 = vrsqrt.pop %v292
    %v392 = vrsqrt.pop %v293
    %v393 = vrsqrt.pop %v294
    %v394 = vrsqrt.pop %v295
    %v395 = vrsqrt.pop %v296
    %v396 = vrsqrt.pop %v297
    %v397 = vrsqrt.pop %v298
    %v398 = vrsqrt.pop %v299
    %v399 = vrsqrt.pop %v300
    %v400 = vrsqrt.pop %v301
    %v401 = vrsqrt.pop %v302
    %v402 = vrsqrt.pop %v303
    %v403 = vrsqrt.pop %v304
    %v404 = vrsqrt.pop %v305
    %v405 = vrsqrt.pop %v306
    %v406 = vrsqrt.pop %v307
    %v407 = vrsqrt.pop %v308
    %v408 = vrsqrt.pop %v309
    %v409 = vrsqrt.pop %v310
    %v410 = vrsqrt.pop %v311
    %v411 = vrsqrt.pop %v312
    %v412 = vrsqrt.pop %v313
    %v413 = vrsqrt.pop %v314
    %v414 = vrsqrt.pop %v315
    %v415 = vrsqrt.pop %v316
    %v416 = vrsqrt.pop %v317
    %v417 = vrsqrt.pop %v318
    %v418 = vmul.f32 %v322, %v370
    %v419 = vmul.f32 %v323, %v371
    %v420 = vmul.f32 %v324, %v372
    %v421 = vmul.f32 %v325, %v373
    %v422 = vmul.f32 %v326, %v374
    %v423 = vmul.f32 %v327, %v375
    %v424 = vmul.f32 %v328, %v376
    %v425 = vmul.f32 %v329, %v377
    %v426 = vmul.f32 %v330, %v378
    %v427 = vmul.f32 %v331, %v379
    %v428 = vmul.f32 %v332, %v380
    %v429 = vmul.f32 %v333, %v381
    %v430 = vmul.f32 %v334, %v382
    %v431 = vmul.f32 %v335, %v383
    %v432 = vmul.f32 %v336, %v384
    %v433 = vmul.f32 %v337, %v385
    %v434 = vmul.f32 %v338, %v386
    %v435 = vmul.f32 %v339, %v387
    %v436 = vmul.f32 %v340, %v388
    %v437 = vmul.f32 %v341, %v389
    %v438 = vmul.f32 %v342, %v390
    %v439 = vmul.f32 %v343, %v391
    %v440 = vmul.f32 %v344, %v392
    %v441 = vmul.f32 %v345, %v393
    %v442 = vmul.f32 %v346, %v394
    %v443 = vmul.f32 %v347, %v395
    %v444 = vmul.f32 %v348, %v396
    %v445 = vmul.f32 %v349, %v397
    %v446 = vmul.f32 %v350, %v398
    %v447 = vmul.f32 %v351, %v399
    %v448 = vmul.f32 %v352, %v400
    %v449 = vmul.f32 %v353, %v401
    %v450 = vmul.f32 %v354, %v402
    %v451 = vmul.f32 %v355, %v403
    %v452 = vmul.f32 %v356, %v404
    %v453 = vmul.f32 %v357, %v405
    %v454 = vmul.f32 %v358, %v406
    %v455 = vmul.f32 %v359, %v407
    %v456 = vmul.f32 %v360, %v408
    %v457 = vmul.f32 %v361, %v409
    %v458 = vmul.f32 %v362, %v410
    %v459 = vmul.f32 %v363, %v411
    %v460 = vmul.f32 %v364, %v412
    %v461 = vmul.f32 %v365, %v413
    %v462 = vmul.f32 %v366, %v414
    %v463 = vmul.f32 %v367, %v415
    %v464 = vmul.f32 %v368, %v416
    %v465 = vmul.f32 %v369, %v417
    %466 = vmatprep.subr.mxu0 0.0
    %467 = vmatpush1.msra.mxu0 %v60
    %468 = vmatprep.subr.mxu0 0.0
    %469 = vmatpush1.msra.mxu0 %v59
    %470 = vmatprep.subr.mxu0 0.0
    %471 = vmatpush1.msra.mxu0 %v58
    %472 = vmatprep.subr.mxu0 0.0
    %473 = vmatpush1.msra.mxu0 %v57
    %474 = vmatprep.subr.mxu0 0.0
    %475 = vmatpush1.msra.mxu0 %v56
    %476 = vmatprep.subr.mxu0 0.0
    %477 = vmatpush1.msra.mxu0 %v55
    %478 = vmatprep.subr.mxu0 0.0
    %479 = vmatpush1.msra.mxu0 %v54
    %480 = vmatprep.subr.mxu0 0.0
    %481 = vmatpush1.msra.mxu0 %v53
    %482 = vmatprep.subr.mxu0 0.0
    %483 = vmatpush1.msra.mxu0 %v52
    %484 = vmatprep.subr.mxu0 0.0
    %485 = vmatpush1.msra.mxu0 %v51
    %486 = vmatprep.subr.mxu0 0.0
    %487 = vmatpush1.msra.mxu0 %v50
    %488 = vmatprep.subr.mxu0 0.0
    %489 = vmatpush1.msra.mxu0 %v49
    %490 = vmatprep.subr.mxu0 0.0
    %491 = vmatpush1.msra.mxu0 %v48
    %492 = vmatprep.subr.mxu0 0.0
    %493 = vmatpush1.msra.mxu0 %v47
    %494 = vmatprep.subr.mxu0 0.0
    %495 = vmatpush1.msra.mxu0 %v46
    %496 = vmatprep.subr.mxu0 0.0
    %497 = vmatpush1.msra.mxu0 %v45
    %498 = vmatprep.subr.mxu0 0.0
    %499 = vmatpush2.msra.mxu0 0.0
    %500 = vmatprep.subr.mxu0 0.0
    %501 = vmatpush2.msra.mxu0 0.0
    %502 = vmatprep.subr.mxu0 0.0
    %503 = vmatpush2.msra.mxu0 0.0
    %504 = vmatprep.subr.mxu0 0.0
    %505 = vmatpush2.msra.mxu0 0.0
    %506 = vmatprep.subr.mxu0 0.0
    %507 = vmatpush2.msra.mxu0 0.0
    %508 = vmatprep.subr.mxu0 0.0
    %509 = vmatpush2.msra.mxu0 0.0
    %510 = vmatprep.subr.mxu0 0.0
    %511 = vmatpush2.msra.mxu0 0.0
    %512 = vmatprep.subr.mxu0 0.0
    %513 = vmatpush2.msra.mxu0 0.0
    %514 = vmatprep.subr.mxu0 0.0
    %515 = vmatpush2.msra.mxu0 0.0
    %516 = vmatprep.subr.mxu0 0.0
    %517 = vmatpush2.msra.mxu0 0.0
    %518 = vmatprep.subr.mxu0 0.0
    %519 = vmatpush2.msra.mxu0 0.0
    %520 = vmatprep.subr.mxu0 0.0
    %521 = vmatpush2.msra.mxu0 0.0
    %522 = vmatprep.subr.mxu0 0.0
    %523 = vmatpush2.msra.mxu0 0.0
    %524 = vmatprep.subr.mxu0 0.0
    %525 = vmatpush2.msra.mxu0 0.0
    %526 = vmatprep.subr.mxu0 0.0
    %527 = vmatpush2.msra.mxu0 0.0
    %528 = vmatprep.subr.mxu0 0.0
    %529 = vmatpush2.msra.mxu0 0.0
    %530 = vmatprep.mubr.f32.mxu0 0.0
    %531 = vmatmul.mubr.f32.gmra.mxu0 %v418
    %v532 = vpop.f32.mrf.mxu0
    %v533 = vadd.f32 0.0, %v532
    %v534 = vpop.f32.mrf.mxu0
    %535 = vmatprep.mubr.f32.mxu0 0.0
    %536 = vmatmul.mubr.f32.gmra.mxu0 %v419
    %v537 = vpop.f32.mrf.mxu0
    %v538 = vadd.f32 0.0, %v537
    %v539 = vpop.f32.mrf.mxu0
    %540 = vmatprep.mubr.f32.mxu0 0.0
    %541 = vmatmul.mubr.f32.gmra.mxu0 %v420
    %v542 = vpop.f32.mrf.mxu0
    %v543 = vadd.f32 0.0, %v542
    %v544 = vpop.f32.mrf.mxu0
    %545 = vmatprep.mubr.f32.mxu0 0.0
    %546 = vmatmul.mubr.f32.gmra.mxu0 %v421
    %v547 = vpop.f32.mrf.mxu0
    %v548 = vadd.f32 0.0, %v547
    %v549 = vpop.f32.mrf.mxu0
    %550 = vmatprep.mubr.f32.mxu0 0.0
    %551 = vmatmul.mubr.f32.gmra.mxu0 %v422
    %v552 = vpop.f32.mrf.mxu0
    %v553 = vadd.f32 0.0, %v552
    %v554 = vpop.f32.mrf.mxu0
    %555 = vmatprep.mubr.f32.mxu0 0.0
    %556 = vmatmul.mubr.f32.gmra.mxu0 %v423
    %v557 = vpop.f32.mrf.mxu0
    %v558 = vadd.f32 0.0, %v557
    %v559 = vpop.f32.mrf.mxu0
    %560 = vmatprep.mubr.f32.mxu0 0.0
    %561 = vmatmul.mubr.f32.gmra.mxu0 %v424
    %v562 = vpop.f32.mrf.mxu0
    %v563 = vadd.f32 0.0, %v562
    %v564 = vpop.f32.mrf.mxu0
    %565 = vmatprep.mubr.f32.mxu0 0.0
    %566 = vmatmul.mubr.f32.gmra.mxu0 %v425
    %v567 = vpop.f32.mrf.mxu0
    %v568 = vadd.f32 0.0, %v567
    %v569 = vpop.f32.mrf.mxu0
    %570 = vmatprep.mubr.f32.mxu0 0.0
    %571 = vmatmul.mubr.f32.gmra.mxu0 %v426
    %v572 = vpop.f32.mrf.mxu0
    %v573 = vadd.f32 0.0, %v572
    %v574 = vpop.f32.mrf.mxu0
    %575 = vmatprep.mubr.f32.mxu0 0.0
    %576 = vmatmul.mubr.f32.gmra.mxu0 %v427
    %v577 = vpop.f32.mrf.mxu0
    %v578 = vadd.f32 0.0, %v577
    %v579 = vpop.f32.mrf.mxu0
    %580 = vmatprep.mubr.f32.mxu0 0.0
    %581 = vmatmul.mubr.f32.gmra.mxu0 %v428
    %v582 = vpop.f32.mrf.mxu0
    %v583 = vadd.f32 0.0, %v582
    %v584 = vpop.f32.mrf.mxu0
    %585 = vmatprep.mubr.f32.mxu0 0.0
    %586 = vmatmul.mubr.f32.gmra.mxu0 %v429
    %v587 = vpop.f32.mrf.mxu0
    %v588 = vadd.f32 0.0, %v587
    %v589 = vpop.f32.mrf.mxu0
    %590 = vmatprep.mubr.f32.mxu0 0.0
    %591 = vmatmul.mubr.f32.gmra.mxu0 %v430
    %v592 = vpop.f32.mrf.mxu0
    %v593 = vadd.f32 0.0, %v592
    %v594 = vpop.f32.mrf.mxu0
    %595 = vmatprep.mubr.f32.mxu0 0.0
    %596 = vmatmul.mubr.f32.gmra.mxu0 %v431
    %v597 = vpop.f32.mrf.mxu0
    %v598 = vadd.f32 0.0, %v597
    %v599 = vpop.f32.mrf.mxu0
    %600 = vmatprep.mubr.f32.mxu0 0.0
    %601 = vmatmul.mubr.f32.gmra.mxu0 %v432
    %v602 = vpop.f32.mrf.mxu0
    %v603 = vadd.f32 0.0, %v602
    %v604 = vpop.f32.mrf.mxu0
    %605 = vmatprep.mubr.f32.mxu0 0.0
    %606 = vmatmul.mubr.f32.gmra.mxu0 %v433
    %v607 = vpop.f32.mrf.mxu0
    %v608 = vadd.f32 0.0, %v607
    %v609 = vpop.f32.mrf.mxu0
    %610 = vmatprep.mubr.f32.mxu0 0.0
    %611 = vmatmul.mubr.f32.gmra.mxu0 %v434
    %v612 = vpop.f32.mrf.mxu0
    %v613 = vadd.f32 0.0, %v612
    %v614 = vpop.f32.mrf.mxu0
    %615 = vmatprep.mubr.f32.mxu0 0.0
    %616 = vmatmul.mubr.f32.gmra.mxu0 %v435
    %v617 = vpop.f32.mrf.mxu0
    %v618 = vadd.f32 0.0, %v617
    %v619 = vpop.f32.mrf.mxu0
    %620 = vmatprep.mubr.f32.mxu0 0.0
    %621 = vmatmul.mubr.f32.gmra.mxu0 %v436
    %v622 = vpop.f32.mrf.mxu0
    %v623 = vadd.f32 0.0, %v622
    %v624 = vpop.f32.mrf.mxu0
    %625 = vmatprep.mubr.f32.mxu0 0.0
    %626 = vmatmul.mubr.f32.gmra.mxu0 %v437
    %v627 = vpop.f32.mrf.mxu0
    %v628 = vadd.f32 0.0, %v627
    %v629 = vpop.f32.mrf.mxu0
    %630 = vmatprep.mubr.f32.mxu0 0.0
    %631 = vmatmul.mubr.f32.gmra.mxu0 %v438
    %v632 = vpop.f32.mrf.mxu0
    %v633 = vadd.f32 0.0, %v632
    %v634 = vpop.f32.mrf.mxu0
    %635 = vmatprep.mubr.f32.mxu0 0.0
    %636 = vmatmul.mubr.f32.gmra.mxu0 %v439
    %v637 = vpop.f32.mrf.mxu0
    %v638 = vadd.f32 0.0, %v637
    %v639 = vpop.f32.mrf.mxu0
    %640 = vmatprep.mubr.f32.mxu0 0.0
    %641 = vmatmul.mubr.f32.gmra.mxu0 %v440
    %v642 = vpop.f32.mrf.mxu0
    %v643 = vadd.f32 0.0, %v642
    %v644 = vpop.f32.mrf.mxu0
    %645 = vmatprep.mubr.f32.mxu0 0.0
    %646 = vmatmul.mubr.f32.gmra.mxu0 %v441
    %v647 = vpop.f32.mrf.mxu0
    %v648 = vadd.f32 0.0, %v647
    %v649 = vpop.f32.mrf.mxu0
    %650 = vmatprep.mubr.f32.mxu0 0.0
    %651 = vmatmul.mubr.f32.gmra.mxu0 %v442
    %v652 = vpop.f32.mrf.mxu0
    %v653 = vadd.f32 0.0, %v652
    %v654 = vpop.f32.mrf.mxu0
    %655 = vmatprep.mubr.f32.mxu0 0.0
    %656 = vmatmul.mubr.f32.gmra.mxu0 %v443
    %v657 = vpop.f32.mrf.mxu0
    %v658 = vadd.f32 0.0, %v657
    %v659 = vpop.f32.mrf.mxu0
    %660 = vmatprep.mubr.f32.mxu0 0.0
    %661 = vmatmul.mubr.f32.gmra.mxu0 %v444
    %v662 = vpop.f32.mrf.mxu0
    %v663 = vadd.f32 0.0, %v662
    %v664 = vpop.f32.mrf.mxu0
    %665 = vmatprep.mubr.f32.mxu0 0.0
    %666 = vmatmul.mubr.f32.gmra.mxu0 %v445
    %v667 = vpop.f32.mrf.mxu0
    %v668 = vadd.f32 0.0, %v667
    %v669 = vpop.f32.mrf.mxu0
    %670 = vmatprep.mubr.f32.mxu0 0.0
    %671 = vmatmul.mubr.f32.gmra.mxu0 %v446
    %v672 = vpop.f32.mrf.mxu0
    %v673 = vadd.f32 0.0, %v672
    %v674 = vpop.f32.mrf.mxu0
    %675 = vmatprep.mubr.f32.mxu0 0.0
    %676 = vmatmul.mubr.f32.gmra.mxu0 %v447
    %v677 = vpop.f32.mrf.mxu0
    %v678 = vadd.f32 0.0, %v677
    %v679 = vpop.f32.mrf.mxu0
    %680 = vmatprep.mubr.f32.mxu0 0.0
    %681 = vmatmul.mubr.f32.gmra.mxu0 %v448
    %v682 = vpop.f32.mrf.mxu0
    %v683 = vadd.f32 0.0, %v682
    %v684 = vpop.f32.mrf.mxu0
    %685 = vmatprep.mubr.f32.mxu0 0.0
    %686 = vmatmul.mubr.f32.gmra.mxu0 %v449
    %v687 = vpop.f32.mrf.mxu0
    %v688 = vadd.f32 0.0, %v687
    %v689 = vpop.f32.mrf.mxu0
    %690 = vmatprep.mubr.f32.mxu0 0.0
    %691 = vmatmul.mubr.f32.gmra.mxu0 %v450
    %v692 = vpop.f32.mrf.mxu0
    %v693 = vadd.f32 0.0, %v692
    %v694 = vpop.f32.mrf.mxu0
    %695 = vmatprep.mubr.f32.mxu0 0.0
    %696 = vmatmul.mubr.f32.gmra.mxu0 %v451
    %v697 = vpop.f32.mrf.mxu0
    %v698 = vadd.f32 0.0, %v697
    %v699 = vpop.f32.mrf.mxu0
    %700 = vmatprep.mubr.f32.mxu0 0.0
    %701 = vmatmul.mubr.f32.gmra.mxu0 %v452
    %v702 = vpop.f32.mrf.mxu0
    %v703 = vadd.f32 0.0, %v702
    %v704 = vpop.f32.mrf.mxu0
    %705 = vmatprep.mubr.f32.mxu0 0.0
    %706 = vmatmul.mubr.f32.gmra.mxu0 %v453
    %v707 = vpop.f32.mrf.mxu0
    %v708 = vadd.f32 0.0, %v707
    %v709 = vpop.f32.mrf.mxu0
    %710 = vmatprep.mubr.f32.mxu0 0.0
    %711 = vmatmul.mubr.f32.gmra.mxu0 %v454
    %v712 = vpop.f32.mrf.mxu0
    %v713 = vadd.f32 0.0, %v712
    %v714 = vpop.f32.mrf.mxu0
    %715 = vmatprep.mubr.f32.mxu0 0.0
    %716 = vmatmul.mubr.f32.gmra.mxu0 %v455
    %v717 = vpop.f32.mrf.mxu0
    %v718 = vadd.f32 0.0, %v717
    %v719 = vpop.f32.mrf.mxu0
    %720 = vmatprep.mubr.f32.mxu0 0.0
    %721 = vmatmul.mubr.f32.gmra.mxu0 %v456
    %v722 = vpop.f32.mrf.mxu0
    %v723 = vadd.f32 0.0, %v722
    %v724 = vpop.f32.mrf.mxu0
    %725 = vmatprep.mubr.f32.mxu0 0.0
    %726 = vmatmul.mubr.f32.gmra.mxu0 %v457
    %v727 = vpop.f32.mrf.mxu0
    %v728 = vadd.f32 0.0, %v727
    %v729 = vpop.f32.mrf.mxu0
    %730 = vmatprep.mubr.f32.mxu0 0.0
    %731 = vmatmul.mubr.f32.gmra.mxu0 %v458
    %v732 = vpop.f32.mrf.mxu0
    %v733 = vadd.f32 0.0, %v732
    %v734 = vpop.f32.mrf.mxu0
    %735 = vmatprep.mubr.f32.mxu0 0.0
    %736 = vmatmul.mubr.f32.gmra.mxu0 %v459
    %v737 = vpop.f32.mrf.mxu0
    %v738 = vadd.f32 0.0, %v737
    %v739 = vpop.f32.mrf.mxu0
    %740 = vmatprep.mubr.f32.mxu0 0.0
    %741 = vmatmul.mubr.f32.gmra.mxu0 %v460
    %v742 = vpop.f32.mrf.mxu0
    %v743 = vadd.f32 0.0, %v742
    %v744 = vpop.f32.mrf.mxu0
    %745 = vmatprep.mubr.f32.mxu0 0.0
    %746 = vmatmul.mubr.f32.gmra.mxu0 %v461
    %v747 = vpop.f32.mrf.mxu0
    %v748 = vadd.f32 0.0, %v747
    %v749 = vpop.f32.mrf.mxu0
    %750 = vmatprep.mubr.f32.mxu0 0.0
    %751 = vmatmul.mubr.f32.gmra.mxu0 %v462
    %v752 = vpop.f32.mrf.mxu0
    %v753 = vadd.f32 0.0, %v752
    %v754 = vpop.f32.mrf.mxu0
    %755 = vmatprep.mubr.f32.mxu0 0.0
    %756 = vmatmul.mubr.f32.gmra.mxu0 %v463
    %v757 = vpop.f32.mrf.mxu0
    %v758 = vadd.f32 0.0, %v757
    %v759 = vpop.f32.mrf.mxu0
    %760 = vmatprep.mubr.f32.mxu0 0.0
    %761 = vmatmul.mubr.f32.gmra.mxu0 %v464
    %v762 = vpop.f32.mrf.mxu0
    %v763 = vadd.f32 0.0, %v762
    %v764 = vpop.f32.mrf.mxu0
    %765 = vmatprep.mubr.f32.mxu0 0.0
    %766 = vmatmul.mubr.f32.gmra.mxu0 %v465
    %v767 = vpop.f32.mrf.mxu0
    %v768 = vadd.f32 0.0, %v767
    %v769 = vpop.f32.mrf.mxu0
    %770 = vdwg.mxu0
    %v771 = vld [vmem:[%s2] sm:$0xff]
    %v772 = vld [vmem:[%s2 + $0x8] sm:$0xff]
    %v773 = vld [vmem:[%s2 + $0x10] sm:$0xff]
    %v774 = vld [vmem:[%s2 + $0x18] sm:$0xff]
    %v775 = vld [vmem:[%s3] sm:$0x1]
    %v777 = vlaneseq
    %v778 = vshrl.u32 %v777, 7
    %v779 = vsub.s32 0, %v778
    %v780 = vrot.slane %v775, %v779
    %vm782 = vcmask 261120
    %v784 = vsel %vm782, %v533, 0
    %v787 = vsel %vm782, %v538, 0
    %v790 = vsel %vm782, %v543, 0
    %v793 = vsel %vm782, %v548, 0
    %v796 = vsel %vm782, %v553, 0
    %v799 = vsel %vm782, %v558, 0
    %v802 = vsel %vm782, %v563, 0
    %v805 = vsel %vm782, %v568, 0
    %v808 = vsel %vm782, %v573, 0
    %v811 = vsel %vm782, %v578, 0
    %v814 = vsel %vm782, %v583, 0
    %v817 = vsel %vm782, %v588, 0
    %v820 = vsel %vm782, %v593, 0
    %v823 = vsel %vm782, %v598, 0
    %v826 = vsel %vm782, %v603, 0
    %v829 = vsel %vm782, %v608, 0
    %v832 = vsel %vm782, %v613, 0
    %v835 = vsel %vm782, %v618, 0
    %v838 = vsel %vm782, %v623, 0
    %v841 = vsel %vm782, %v628, 0
    %v844 = vsel %vm782, %v633, 0
    %v847 = vsel %vm782, %v638, 0
    %v850 = vsel %vm782, %v643, 0
    %v853 = vsel %vm782, %v648, 0
    %v856 = vsel %vm782, %v653, 0
    %v859 = vsel %vm782, %v658, 0
    %v862 = vsel %vm782, %v663, 0
    %v865 = vsel %vm782, %v668, 0
    %v868 = vsel %vm782, %v673, 0
    %v871 = vsel %vm782, %v678, 0
    %v874 = vsel %vm782, %v683, 0
    %v877 = vsel %vm782, %v688, 0
    %v880 = vsel %vm782, %v693, 0
    %v883 = vsel %vm782, %v698, 0
    %v886 = vsel %vm782, %v703, 0
    %v889 = vsel %vm782, %v708, 0
    %v892 = vsel %vm782, %v713, 0
    %v895 = vsel %vm782, %v718, 0
    %v898 = vsel %vm782, %v723, 0
    %v901 = vsel %vm782, %v728, 0
    %v904 = vsel %vm782, %v733, 0
    %v907 = vsel %vm782, %v738, 0
    %v910 = vsel %vm782, %v743, 0
    %v913 = vsel %vm782, %v748, 0
    %v916 = vsel %vm782, %v753, 0
    %v919 = vsel %vm782, %v758, 0
    %v922 = vsel %vm782, %v763, 0
    %v925 = vsel %vm782, %v768, 0
    %927 = vmatprep.subr.mxu0 0.0
    %928 = vmatpush1.msra.mxu0 0.0
    %929 = vmatprep.subr.mxu0 0.0
    %930 = vmatpush1.msra.mxu0 0.0
    %931 = vmatprep.subr.mxu0 0.0
    %932 = vmatpush1.msra.mxu0 0.0
    %933 = vmatprep.subr.mxu0 0.0
    %934 = vmatpush1.msra.mxu0 0.0
    %935 = vmatprep.subr.mxu0 0.0
    %936 = vmatpush1.msra.mxu0 0.0
    %937 = vmatprep.subr.mxu0 0.0
    %938 = vmatpush1.msra.mxu0 0.0
    %939 = vmatprep.subr.mxu0 0.0
    %940 = vmatpush1.msra.mxu0 0.0
    %941 = vmatprep.subr.mxu0 0.0
    %942 = vmatpush1.msra.mxu0 0.0
    %943 = vmatprep.subr.mxu0 0.0
    %944 = vmatpush1.msra.mxu0 0.0
    %945 = vmatprep.subr.mxu0 0.0
    %946 = vmatpush1.msra.mxu0 0.0
    %947 = vmatprep.subr.mxu0 0.0
    %948 = vmatpush1.msra.mxu0 0.0
    %949 = vmatprep.subr.mxu0 0.0
    %950 = vmatpush1.msra.mxu0 0.0
    %951 = vmatprep.subr.mxu0 0.0
    %952 = vmatpush1.msra.mxu0 %v774
    %953 = vmatprep.subr.mxu0 0.0
    %954 = vmatpush1.msra.mxu0 %v773
    %955 = vmatprep.subr.mxu0 0.0
    %956 = vmatpush1.msra.mxu0 %v772
    %957 = vmatprep.subr.mxu0 0.0
    %958 = vmatpush1.msra.mxu0 %v771
    %959 = vmatprep.subr.mxu0 0.0
    %960 = vmatpush2.msra.mxu0 0.0
    %961 = vmatprep.subr.mxu0 0.0
    %962 = vmatpush2.msra.mxu0 0.0
    %963 = vmatprep.subr.mxu0 0.0
    %964 = vmatpush2.msra.mxu0 0.0
    %965 = vmatprep.subr.mxu0 0.0
    %966 = vmatpush2.msra.mxu0 0.0
    %967 = vmatprep.subr.mxu0 0.0
    %968 = vmatpush2.msra.mxu0 0.0
    %969 = vmatprep.subr.mxu0 0.0
    %970 = vmatpush2.msra.mxu0 0.0
    %971 = vmatprep.subr.mxu0 0.0
    %972 = vmatpush2.msra.mxu0 0.0
    %973 = vmatprep.subr.mxu0 0.0
    %974 = vmatpush2.msra.mxu0 0.0
    %975 = vmatprep.subr.mxu0 0.0
    %976 = vmatpush2.msra.mxu0 0.0
    %977 = vmatprep.subr.mxu0 0.0
    %978 = vmatpush2.msra.mxu0 0.0
    %979 = vmatprep.subr.mxu0 0.0
    %980 = vmatpush2.msra.mxu0 0.0
    %981 = vmatprep.subr.mxu0 0.0
    %982 = vmatpush2.msra.mxu0 0.0
    %983 = vmatprep.subr.mxu0 0.0
    %984 = vmatpush2.msra.mxu0 0.0
    %985 = vmatprep.subr.mxu0 0.0
    %986 = vmatpush2.msra.mxu0 0.0
    %987 = vmatprep.subr.mxu0 0.0
    %988 = vmatpush2.msra.mxu0 0.0
    %989 = vmatprep.subr.mxu0 0.0
    %990 = vmatpush2.msra.mxu0 0.0
    %991 = vmatprep.mubr.f32.mxu0 0.0
    %992 = vmatmul.mubr.f32.gmra.mxu0 %v784
    %v993 = vpop.f32.mrf.mxu0
    %v994 = vadd.f32 %v780, %v993
    %v995 = vpop.f32.mrf.mxu0
    %996 = vmatprep.mubr.f32.mxu0 0.0
    %997 = vmatmul.mubr.f32.gmra.mxu0 %v787
    %v998 = vpop.f32.mrf.mxu0
    %v999 = vadd.f32 %v780, %v998
    %v1000 = vpop.f32.mrf.mxu0
    %1001 = vmatprep.mubr.f32.mxu0 0.0
    %1002 = vmatmul.mubr.f32.gmra.mxu0 %v790
    %v1003 = vpop.f32.mrf.mxu0
    %v1004 = vadd.f32 %v780, %v1003
    %v1005 = vpop.f32.mrf.mxu0
    %1006 = vmatprep.mubr.f32.mxu0 0.0
    %1007 = vmatmul.mubr.f32.gmra.mxu0 %v793
    %v1008 = vpop.f32.mrf.mxu0
    %v1009 = vadd.f32 %v780, %v1008
    %v1010 = vpop.f32.mrf.mxu0
    %1011 = vmatprep.mubr.f32.mxu0 0.0
    %1012 = vmatmul.mubr.f32.gmra.mxu0 %v796
    %v1013 = vpop.f32.mrf.mxu0
    %v1014 = vadd.f32 %v780, %v1013
    %v1015 = vpop.f32.mrf.mxu0
    %1016 = vmatprep.mubr.f32.mxu0 0.0
    %1017 = vmatmul.mubr.f32.gmra.mxu0 %v799
    %v1018 = vpop.f32.mrf.mxu0
    %v1019 = vadd.f32 %v780, %v1018
    %v1020 = vpop.f32.mrf.mxu0
    %1021 = vmatprep.mubr.f32.mxu0 0.0
    %1022 = vmatmul.mubr.f32.gmra.mxu0 %v802
    %v1023 = vpop.f32.mrf.mxu0
    %v1024 = vadd.f32 %v780, %v1023
    %v1025 = vpop.f32.mrf.mxu0
    %1026 = vmatprep.mubr.f32.mxu0 0.0
    %1027 = vmatmul.mubr.f32.gmra.mxu0 %v805
    %v1028 = vpop.f32.mrf.mxu0
    %v1029 = vadd.f32 %v780, %v1028
    %v1030 = vpop.f32.mrf.mxu0
    %1031 = vmatprep.mubr.f32.mxu0 0.0
    %1032 = vmatmul.mubr.f32.gmra.mxu0 %v808
    %v1033 = vpop.f32.mrf.mxu0
    %v1034 = vadd.f32 %v780, %v1033
    %v1035 = vpop.f32.mrf.mxu0
    %1036 = vmatprep.mubr.f32.mxu0 0.0
    %1037 = vmatmul.mubr.f32.gmra.mxu0 %v811
    %v1038 = vpop.f32.mrf.mxu0
    %v1039 = vadd.f32 %v780, %v1038
    %v1040 = vpop.f32.mrf.mxu0
    %1041 = vmatprep.mubr.f32.mxu0 0.0
    %1042 = vmatmul.mubr.f32.gmra.mxu0 %v814
    %v1043 = vpop.f32.mrf.mxu0
    %v1044 = vadd.f32 %v780, %v1043
    %v1045 = vpop.f32.mrf.mxu0
    %1046 = vmatprep.mubr.f32.mxu0 0.0
    %1047 = vmatmul.mubr.f32.gmra.mxu0 %v817
    %v1048 = vpop.f32.mrf.mxu0
    %v1049 = vadd.f32 %v780, %v1048
    %v1050 = vpop.f32.mrf.mxu0
    %1051 = vmatprep.mubr.f32.mxu0 0.0
    %1052 = vmatmul.mubr.f32.gmra.mxu0 %v820
    %v1053 = vpop.f32.mrf.mxu0
    %v1054 = vadd.f32 %v780, %v1053
    %v1055 = vpop.f32.mrf.mxu0
    %1056 = vmatprep.mubr.f32.mxu0 0.0
    %1057 = vmatmul.mubr.f32.gmra.mxu0 %v823
    %v1058 = vpop.f32.mrf.mxu0
    %v1059 = vadd.f32 %v780, %v1058
    %v1060 = vpop.f32.mrf.mxu0
    %1061 = vmatprep.mubr.f32.mxu0 0.0
    %1062 = vmatmul.mubr.f32.gmra.mxu0 %v826
    %v1063 = vpop.f32.mrf.mxu0
    %v1064 = vadd.f32 %v780, %v1063
    %v1065 = vpop.f32.mrf.mxu0
    %1066 = vmatprep.mubr.f32.mxu0 0.0
    %1067 = vmatmul.mubr.f32.gmra.mxu0 %v829
    %v1068 = vpop.f32.mrf.mxu0
    %v1069 = vadd.f32 %v780, %v1068
    %v1070 = vpop.f32.mrf.mxu0
    %1071 = vmatprep.mubr.f32.mxu0 0.0
    %1072 = vmatmul.mubr.f32.gmra.mxu0 %v832
    %v1073 = vpop.f32.mrf.mxu0
    %v1074 = vadd.f32 %v780, %v1073
    %v1075 = vpop.f32.mrf.mxu0
    %1076 = vmatprep.mubr.f32.mxu0 0.0
    %1077 = vmatmul.mubr.f32.gmra.mxu0 %v835
    %v1078 = vpop.f32.mrf.mxu0
    %v1079 = vadd.f32 %v780, %v1078
    %v1080 = vpop.f32.mrf.mxu0
    %1081 = vmatprep.mubr.f32.mxu0 0.0
    %1082 = vmatmul.mubr.f32.gmra.mxu0 %v838
    %v1083 = vpop.f32.mrf.mxu0
    %v1084 = vadd.f32 %v780, %v1083
    %v1085 = vpop.f32.mrf.mxu0
    %1086 = vmatprep.mubr.f32.mxu0 0.0
    %1087 = vmatmul.mubr.f32.gmra.mxu0 %v841
    %v1088 = vpop.f32.mrf.mxu0
    %v1089 = vadd.f32 %v780, %v1088
    %v1090 = vpop.f32.mrf.mxu0
    %1091 = vmatprep.mubr.f32.mxu0 0.0
    %1092 = vmatmul.mubr.f32.gmra.mxu0 %v844
    %v1093 = vpop.f32.mrf.mxu0
    %v1094 = vadd.f32 %v780, %v1093
    %v1095 = vpop.f32.mrf.mxu0
    %1096 = vmatprep.mubr.f32.mxu0 0.0
    %1097 = vmatmul.mubr.f32.gmra.mxu0 %v847
    %v1098 = vpop.f32.mrf.mxu0
    %v1099 = vadd.f32 %v780, %v1098
    %v1100 = vpop.f32.mrf.mxu0
    %1101 = vmatprep.mubr.f32.mxu0 0.0
    %1102 = vmatmul.mubr.f32.gmra.mxu0 %v850
    %v1103 = vpop.f32.mrf.mxu0
    %v1104 = vadd.f32 %v780, %v1103
    %v1105 = vpop.f32.mrf.mxu0
    %1106 = vmatprep.mubr.f32.mxu0 0.0
    %1107 = vmatmul.mubr.f32.gmra.mxu0 %v853
    %v1108 = vpop.f32.mrf.mxu0
    %v1109 = vadd.f32 %v780, %v1108
    %v1110 = vpop.f32.mrf.mxu0
    %1111 = vmatprep.mubr.f32.mxu0 0.0
    %1112 = vmatmul.mubr.f32.gmra.mxu0 %v856
    %v1113 = vpop.f32.mrf.mxu0
    %v1114 = vadd.f32 %v780, %v1113
    %v1115 = vpop.f32.mrf.mxu0
    %1116 = vmatprep.mubr.f32.mxu0 0.0
    %1117 = vmatmul.mubr.f32.gmra.mxu0 %v859
    %v1118 = vpop.f32.mrf.mxu0
    %v1119 = vadd.f32 %v780, %v1118
    %v1120 = vpop.f32.mrf.mxu0
    %1121 = vmatprep.mubr.f32.mxu0 0.0
    %1122 = vmatmul.mubr.f32.gmra.mxu0 %v862
    %v1123 = vpop.f32.mrf.mxu0
    %v1124 = vadd.f32 %v780, %v1123
    %v1125 = vpop.f32.mrf.mxu0
    %1126 = vmatprep.mubr.f32.mxu0 0.0
    %1127 = vmatmul.mubr.f32.gmra.mxu0 %v865
    %v1128 = vpop.f32.mrf.mxu0
    %v1129 = vadd.f32 %v780, %v1128
    %v1130 = vpop.f32.mrf.mxu0
    %1131 = vmatprep.mubr.f32.mxu0 0.0
    %1132 = vmatmul.mubr.f32.gmra.mxu0 %v868
    %v1133 = vpop.f32.mrf.mxu0
    %v1134 = vadd.f32 %v780, %v1133
    %v1135 = vpop.f32.mrf.mxu0
    %1136 = vmatprep.mubr.f32.mxu0 0.0
    %1137 = vmatmul.mubr.f32.gmra.mxu0 %v871
    %v1138 = vpop.f32.mrf.mxu0
    %v1139 = vadd.f32 %v780, %v1138
    %v1140 = vpop.f32.mrf.mxu0
    %1141 = vmatprep.mubr.f32.mxu0 0.0
    %1142 = vmatmul.mubr.f32.gmra.mxu0 %v874
    %v1143 = vpop.f32.mrf.mxu0
    %v1144 = vadd.f32 %v780, %v1143
    %v1145 = vpop.f32.mrf.mxu0
    %1146 = vmatprep.mubr.f32.mxu0 0.0
    %1147 = vmatmul.mubr.f32.gmra.mxu0 %v877
    %v1148 = vpop.f32.mrf.mxu0
    %v1149 = vadd.f32 %v780, %v1148
    %v1150 = vpop.f32.mrf.mxu0
    %1151 = vmatprep.mubr.f32.mxu0 0.0
    %1152 = vmatmul.mubr.f32.gmra.mxu0 %v880
    %v1153 = vpop.f32.mrf.mxu0
    %v1154 = vadd.f32 %v780, %v1153
    %v1155 = vpop.f32.mrf.mxu0
    %1156 = vmatprep.mubr.f32.mxu0 0.0
    %1157 = vmatmul.mubr.f32.gmra.mxu0 %v883
    %v1158 = vpop.f32.mrf.mxu0
    %v1159 = vadd.f32 %v780, %v1158
    %v1160 = vpop.f32.mrf.mxu0
    %1161 = vmatprep.mubr.f32.mxu0 0.0
    %1162 = vmatmul.mubr.f32.gmra.mxu0 %v886
    %v1163 = vpop.f32.mrf.mxu0
    %v1164 = vadd.f32 %v780, %v1163
    %v1165 = vpop.f32.mrf.mxu0
    %1166 = vmatprep.mubr.f32.mxu0 0.0
    %1167 = vmatmul.mubr.f32.gmra.mxu0 %v889
    %v1168 = vpop.f32.mrf.mxu0
    %v1169 = vadd.f32 %v780, %v1168
    %v1170 = vpop.f32.mrf.mxu0
    %1171 = vmatprep.mubr.f32.mxu0 0.0
    %1172 = vmatmul.mubr.f32.gmra.mxu0 %v892
    %v1173 = vpop.f32.mrf.mxu0
    %v1174 = vadd.f32 %v780, %v1173
    %v1175 = vpop.f32.mrf.mxu0
    %1176 = vmatprep.mubr.f32.mxu0 0.0
    %1177 = vmatmul.mubr.f32.gmra.mxu0 %v895
    %v1178 = vpop.f32.mrf.mxu0
    %v1179 = vadd.f32 %v780, %v1178
    %v1180 = vpop.f32.mrf.mxu0
    %1181 = vmatprep.mubr.f32.mxu0 0.0
    %1182 = vmatmul.mubr.f32.gmra.mxu0 %v898
    %v1183 = vpop.f32.mrf.mxu0
    %v1184 = vadd.f32 %v780, %v1183
    %v1185 = vpop.f32.mrf.mxu0
    %1186 = vmatprep.mubr.f32.mxu0 0.0
    %1187 = vmatmul.mubr.f32.gmra.mxu0 %v901
    %v1188 = vpop.f32.mrf.mxu0
    %v1189 = vadd.f32 %v780, %v1188
    %v1190 = vpop.f32.mrf.mxu0
    %1191 = vmatprep.mubr.f32.mxu0 0.0
    %1192 = vmatmul.mubr.f32.gmra.mxu0 %v904
    %v1193 = vpop.f32.mrf.mxu0
    %v1194 = vadd.f32 %v780, %v1193
    %v1195 = vpop.f32.mrf.mxu0
    %1196 = vmatprep.mubr.f32.mxu0 0.0
    %1197 = vmatmul.mubr.f32.gmra.mxu0 %v907
    %v1198 = vpop.f32.mrf.mxu0
    %v1199 = vadd.f32 %v780, %v1198
    %v1200 = vpop.f32.mrf.mxu0
    %1201 = vmatprep.mubr.f32.mxu0 0.0
    %1202 = vmatmul.mubr.f32.gmra.mxu0 %v910
    %v1203 = vpop.f32.mrf.mxu0
    %v1204 = vadd.f32 %v780, %v1203
    %v1205 = vpop.f32.mrf.mxu0
    %1206 = vmatprep.mubr.f32.mxu0 0.0
    %1207 = vmatmul.mubr.f32.gmra.mxu0 %v913
    %v1208 = vpop.f32.mrf.mxu0
    %v1209 = vadd.f32 %v780, %v1208
    %v1210 = vpop.f32.mrf.mxu0
    %1211 = vmatprep.mubr.f32.mxu0 0.0
    %1212 = vmatmul.mubr.f32.gmra.mxu0 %v916
    %v1213 = vpop.f32.mrf.mxu0
    %v1214 = vadd.f32 %v780, %v1213
    %v1215 = vpop.f32.mrf.mxu0
    %1216 = vmatprep.mubr.f32.mxu0 0.0
    %1217 = vmatmul.mubr.f32.gmra.mxu0 %v919
    %v1218 = vpop.f32.mrf.mxu0
    %v1219 = vadd.f32 %v780, %v1218
    %v1220 = vpop.f32.mrf.mxu0
    %1221 = vmatprep.mubr.f32.mxu0 0.0
    %1222 = vmatmul.mubr.f32.gmra.mxu0 %v922
    %v1223 = vpop.f32.mrf.mxu0
    %v1224 = vadd.f32 %v780, %v1223
    %v1225 = vpop.f32.mrf.mxu0
    %1226 = vmatprep.mubr.f32.mxu0 0.0
    %1227 = vmatmul.mubr.f32.gmra.mxu0 %v925
    %v1228 = vpop.f32.mrf.mxu0
    %v1229 = vadd.f32 %v780, %v1228
    %v1230 = vpop.f32.mrf.mxu0
    %1231 = vdwg.mxu0
    %v1232 = vmax.f32 %v994, 0.0
    %v1233 = vmax.f32 %v999, 0.0
    %v1234 = vmax.f32 %v1004, 0.0
    %v1235 = vmax.f32 %v1009, 0.0
    %v1236 = vmax.f32 %v1014, 0.0
    %v1237 = vmax.f32 %v1019, 0.0
    %v1238 = vmax.f32 %v1024, 0.0
    %v1239 = vmax.f32 %v1029, 0.0
    %v1240 = vmax.f32 %v1034, 0.0
    %v1241 = vmax.f32 %v1039, 0.0
    %v1242 = vmax.f32 %v1044, 0.0
    %v1243 = vmax.f32 %v1049, 0.0
    %v1244 = vmax.f32 %v1054, 0.0
    %v1245 = vmax.f32 %v1059, 0.0
    %v1246 = vmax.f32 %v1064, 0.0
    %v1247 = vmax.f32 %v1069, 0.0
    %v1248 = vmax.f32 %v1074, 0.0
    %v1249 = vmax.f32 %v1079, 0.0
    %v1250 = vmax.f32 %v1084, 0.0
    %v1251 = vmax.f32 %v1089, 0.0
    %v1252 = vmax.f32 %v1094, 0.0
    %v1253 = vmax.f32 %v1099, 0.0
    %v1254 = vmax.f32 %v1104, 0.0
    %v1255 = vmax.f32 %v1109, 0.0
    %v1256 = vmax.f32 %v1114, 0.0
    %v1257 = vmax.f32 %v1119, 0.0
    %v1258 = vmax.f32 %v1124, 0.0
    %v1259 = vmax.f32 %v1129, 0.0
    %v1260 = vmax.f32 %v1134, 0.0
    %v1261 = vmax.f32 %v1139, 0.0
    %v1262 = vmax.f32 %v1144, 0.0
    %v1263 = vmax.f32 %v1149, 0.0
    %v1264 = vmax.f32 %v1154, 0.0
    %v1265 = vmax.f32 %v1159, 0.0
    %v1266 = vmax.f32 %v1164, 0.0
    %v1267 = vmax.f32 %v1169, 0.0
    %v1268 = vmax.f32 %v1174, 0.0
    %v1269 = vmax.f32 %v1179, 0.0
    %v1270 = vmax.f32 %v1184, 0.0
    %v1271 = vmax.f32 %v1189, 0.0
    %v1272 = vmax.f32 %v1194, 0.0
    %v1273 = vmax.f32 %v1199, 0.0
    %v1274 = vmax.f32 %v1204, 0.0
    %v1275 = vmax.f32 %v1209, 0.0
    %v1276 = vmax.f32 %v1214, 0.0
    %v1277 = vmax.f32 %v1219, 0.0
    %v1278 = vmax.f32 %v1224, 0.0
    %v1279 = vmax.f32 %v1229, 0.0
    %v1280 = vld [vmem:[%s4] sm:$0xff]
    %v1281 = vld [vmem:[%s4 + $0x8] sm:$0xff]
    %v1282 = vld [vmem:[%s4 + $0x10] sm:$0xff]
    %v1283 = vld [vmem:[%s4 + $0x18] sm:$0xff]
    %v1284 = vld [vmem:[%s5] sm:$0x1]
    %v1286 = vlaneseq
    %v1287 = vshrl.u32 %v1286, 7
    %v1288 = vsub.s32 0, %v1287
    %v1289 = vrot.slane %v1284, %v1288
    %v1292 = vsel %vm782, %v1232, 0
    %v1295 = vsel %vm782, %v1233, 0
    %v1298 = vsel %vm782, %v1234, 0
    %v1301 = vsel %vm782, %v1235, 0
    %v1304 = vsel %vm782, %v1236, 0
    %v1307 = vsel %vm782, %v1237, 0
    %v1310 = vsel %vm782, %v1238, 0
    %v1313 = vsel %vm782, %v1239, 0
    %v1316 = vsel %vm782, %v1240, 0
    %v1319 = vsel %vm782, %v1241, 0
    %v1322 = vsel %vm782, %v1242, 0
    %v1325 = vsel %vm782, %v1243, 0
    %v1328 = vsel %vm782, %v1244, 0
    %v1331 = vsel %vm782, %v1245, 0
    %v1334 = vsel %vm782, %v1246, 0
    %v1337 = vsel %vm782, %v1247, 0
    %v1340 = vsel %vm782, %v1248, 0
    %v1343 = vsel %vm782, %v1249, 0
    %v1346 = vsel %vm782, %v1250, 0
    %v1349 = vsel %vm782, %v1251, 0
    %v1352 = vsel %vm782, %v1252, 0
    %v1355 = vsel %vm782, %v1253, 0
    %v1358 = vsel %vm782, %v1254, 0
    %v1361 = vsel %vm782, %v1255, 0
    %v1364 = vsel %vm782, %v1256, 0
    %v1367 = vsel %vm782, %v1257, 0
    %v1370 = vsel %vm782, %v1258, 0
    %v1373 = vsel %vm782, %v1259, 0
    %v1376 = vsel %vm782, %v1260, 0
    %v1379 = vsel %vm782, %v1261, 0
    %v1382 = vsel %vm782, %v1262, 0
    %v1385 = vsel %vm782, %v1263, 0
    %v1388 = vsel %vm782, %v1264, 0
    %v1391 = vsel %vm782, %v1265, 0
    %v1394 = vsel %vm782, %v1266, 0
    %v1397 = vsel %vm782, %v1267, 0
    %v1400 = vsel %vm782, %v1268, 0
    %v1403 = vsel %vm782, %v1269, 0
    %v1406 = vsel %vm782, %v1270, 0
    %v1409 = vsel %vm782, %v1271, 0
    %v1412 = vsel %vm782, %v1272, 0
    %v1415 = vsel %vm782, %v1273, 0
    %v1418 = vsel %vm782, %v1274, 0
    %v1421 = vsel %vm782, %v1275, 0
    %v1424 = vsel %vm782, %v1276, 0
    %v1427 = vsel %vm782, %v1277, 0
    %v1430 = vsel %vm782, %v1278, 0
    %v1433 = vsel %vm782, %v1279, 0
    %1435 = vmatprep.subr.mxu0 0.0
    %1436 = vmatpush1.msra.mxu0 0.0
    %1437 = vmatprep.subr.mxu0 0.0
    %1438 = vmatpush1.msra.mxu0 0.0
    %1439 = vmatprep.subr.mxu0 0.0
    %1440 = vmatpush1.msra.mxu0 0.0
    %1441 = vmatprep.subr.mxu0 0.0
    %1442 = vmatpush1.msra.mxu0 0.0
    %1443 = vmatprep.subr.mxu0 0.0
    %1444 = vmatpush1.msra.mxu0 0.0
    %1445 = vmatprep.subr.mxu0 0.0
    %1446 = vmatpush1.msra.mxu0 0.0
    %1447 = vmatprep.subr.mxu0 0.0
    %1448 = vmatpush1.msra.mxu0 0.0
    %1449 = vmatprep.subr.mxu0 0.0
    %1450 = vmatpush1.msra.mxu0 0.0
    %1451 = vmatprep.subr.mxu0 0.0
    %1452 = vmatpush1.msra.mxu0 0.0
    %1453 = vmatprep.subr.mxu0 0.0
    %1454 = vmatpush1.msra.mxu0 0.0
    %1455 = vmatprep.subr.mxu0 0.0
    %1456 = vmatpush1.msra.mxu0 0.0
    %1457 = vmatprep.subr.mxu0 0.0
    %1458 = vmatpush1.msra.mxu0 0.0
    %1459 = vmatprep.subr.mxu0 0.0
    %1460 = vmatpush1.msra.mxu0 %v1283
    %1461 = vmatprep.subr.mxu0 0.0
    %1462 = vmatpush1.msra.mxu0 %v1282
    %1463 = vmatprep.subr.mxu0 0.0
    %1464 = vmatpush1.msra.mxu0 %v1281
    %1465 = vmatprep.subr.mxu0 0.0
    %1466 = vmatpush1.msra.mxu0 %v1280
    %1467 = vmatprep.subr.mxu0 0.0
    %1468 = vmatpush2.msra.mxu0 0.0
    %1469 = vmatprep.subr.mxu0 0.0
    %1470 = vmatpush2.msra.mxu0 0.0
    %1471 = vmatprep.subr.mxu0 0.0
    %1472 = vmatpush2.msra.mxu0 0.0
    %1473 = vmatprep.subr.mxu0 0.0
    %1474 = vmatpush2.msra.mxu0 0.0
    %1475 = vmatprep.subr.mxu0 0.0
    %1476 = vmatpush2.msra.mxu0 0.0
    %1477 = vmatprep.subr.mxu0 0.0
    %1478 = vmatpush2.msra.mxu0 0.0
    %1479 = vmatprep.subr.mxu0 0.0
    %1480 = vmatpush2.msra.mxu0 0.0
    %1481 = vmatprep.subr.mxu0 0.0
    %1482 = vmatpush2.msra.mxu0 0.0
    %1483 = vmatprep.subr.mxu0 0.0
    %1484 = vmatpush2.msra.mxu0 0.0
    %1485 = vmatprep.subr.mxu0 0.0
    %1486 = vmatpush2.msra.mxu0 0.0
    %1487 = vmatprep.subr.mxu0 0.0
    %1488 = vmatpush2.msra.mxu0 0.0
    %1489 = vmatprep.subr.mxu0 0.0
    %1490 = vmatpush2.msra.mxu0 0.0
    %1491 = vmatprep.subr.mxu0 0.0
    %1492 = vmatpush2.msra.mxu0 0.0
    %1493 = vmatprep.subr.mxu0 0.0
    %1494 = vmatpush2.msra.mxu0 0.0
    %1495 = vmatprep.subr.mxu0 0.0
    %1496 = vmatpush2.msra.mxu0 0.0
    %1497 = vmatprep.subr.mxu0 0.0
    %1498 = vmatpush2.msra.mxu0 0.0
    %1499 = vmatprep.mubr.f32.mxu0 0.0
    %1500 = vmatmul.mubr.f32.gmra.mxu0 %v1292
    %v1501 = vpop.f32.mrf.mxu0
    %v1502 = vadd.f32 %v1289, %v1501
    %v1503 = vpop.f32.mrf.mxu0
    %1504 = vmatprep.mubr.f32.mxu0 0.0
    %1505 = vmatmul.mubr.f32.gmra.mxu0 %v1295
    %v1506 = vpop.f32.mrf.mxu0
    %v1507 = vadd.f32 %v1289, %v1506
    %v1508 = vpop.f32.mrf.mxu0
    %1509 = vmatprep.mubr.f32.mxu0 0.0
    %1510 = vmatmul.mubr.f32.gmra.mxu0 %v1298
    %v1511 = vpop.f32.mrf.mxu0
    %v1512 = vadd.f32 %v1289, %v1511
    %v1513 = vpop.f32.mrf.mxu0
    %1514 = vmatprep.mubr.f32.mxu0 0.0
    %1515 = vmatmul.mubr.f32.gmra.mxu0 %v1301
    %v1516 = vpop.f32.mrf.mxu0
    %v1517 = vadd.f32 %v1289, %v1516
    %v1518 = vpop.f32.mrf.mxu0
    %1519 = vmatprep.mubr.f32.mxu0 0.0
    %1520 = vmatmul.mubr.f32.gmra.mxu0 %v1304
    %v1521 = vpop.f32.mrf.mxu0
    %v1522 = vadd.f32 %v1289, %v1521
    %v1523 = vpop.f32.mrf.mxu0
    %1524 = vmatprep.mubr.f32.mxu0 0.0
    %1525 = vmatmul.mubr.f32.gmra.mxu0 %v1307
    %v1526 = vpop.f32.mrf.mxu0
    %v1527 = vadd.f32 %v1289, %v1526
    %v1528 = vpop.f32.mrf.mxu0
    %1529 = vmatprep.mubr.f32.mxu0 0.0
    %1530 = vmatmul.mubr.f32.gmra.mxu0 %v1310
    %v1531 = vpop.f32.mrf.mxu0
    %v1532 = vadd.f32 %v1289, %v1531
    %v1533 = vpop.f32.mrf.mxu0
    %1534 = vmatprep.mubr.f32.mxu0 0.0
    %1535 = vmatmul.mubr.f32.gmra.mxu0 %v1313
    %v1536 = vpop.f32.mrf.mxu0
    %v1537 = vadd.f32 %v1289, %v1536
    %v1538 = vpop.f32.mrf.mxu0
    %1539 = vmatprep.mubr.f32.mxu0 0.0
    %1540 = vmatmul.mubr.f32.gmra.mxu0 %v1316
    %v1541 = vpop.f32.mrf.mxu0
    %v1542 = vadd.f32 %v1289, %v1541
    %v1543 = vpop.f32.mrf.mxu0
    %1544 = vmatprep.mubr.f32.mxu0 0.0
    %1545 = vmatmul.mubr.f32.gmra.mxu0 %v1319
    %v1546 = vpop.f32.mrf.mxu0
    %v1547 = vadd.f32 %v1289, %v1546
    %v1548 = vpop.f32.mrf.mxu0
    %1549 = vmatprep.mubr.f32.mxu0 0.0
    %1550 = vmatmul.mubr.f32.gmra.mxu0 %v1322
    %v1551 = vpop.f32.mrf.mxu0
    %v1552 = vadd.f32 %v1289, %v1551
    %v1553 = vpop.f32.mrf.mxu0
    %1554 = vmatprep.mubr.f32.mxu0 0.0
    %1555 = vmatmul.mubr.f32.gmra.mxu0 %v1325
    %v1556 = vpop.f32.mrf.mxu0
    %v1557 = vadd.f32 %v1289, %v1556
    %v1558 = vpop.f32.mrf.mxu0
    %1559 = vmatprep.mubr.f32.mxu0 0.0
    %1560 = vmatmul.mubr.f32.gmra.mxu0 %v1328
    %v1561 = vpop.f32.mrf.mxu0
    %v1562 = vadd.f32 %v1289, %v1561
    %v1563 = vpop.f32.mrf.mxu0
    %1564 = vmatprep.mubr.f32.mxu0 0.0
    %1565 = vmatmul.mubr.f32.gmra.mxu0 %v1331
    %v1566 = vpop.f32.mrf.mxu0
    %v1567 = vadd.f32 %v1289, %v1566
    %v1568 = vpop.f32.mrf.mxu0
    %1569 = vmatprep.mubr.f32.mxu0 0.0
    %1570 = vmatmul.mubr.f32.gmra.mxu0 %v1334
    %v1571 = vpop.f32.mrf.mxu0
    %v1572 = vadd.f32 %v1289, %v1571
    %v1573 = vpop.f32.mrf.mxu0
    %1574 = vmatprep.mubr.f32.mxu0 0.0
    %1575 = vmatmul.mubr.f32.gmra.mxu0 %v1337
    %v1576 = vpop.f32.mrf.mxu0
    %v1577 = vadd.f32 %v1289, %v1576
    %v1578 = vpop.f32.mrf.mxu0
    %1579 = vmatprep.mubr.f32.mxu0 0.0
    %1580 = vmatmul.mubr.f32.gmra.mxu0 %v1340
    %v1581 = vpop.f32.mrf.mxu0
    %v1582 = vadd.f32 %v1289, %v1581
    %v1583 = vpop.f32.mrf.mxu0
    %1584 = vmatprep.mubr.f32.mxu0 0.0
    %1585 = vmatmul.mubr.f32.gmra.mxu0 %v1343
    %v1586 = vpop.f32.mrf.mxu0
    %v1587 = vadd.f32 %v1289, %v1586
    %v1588 = vpop.f32.mrf.mxu0
    %1589 = vmatprep.mubr.f32.mxu0 0.0
    %1590 = vmatmul.mubr.f32.gmra.mxu0 %v1346
    %v1591 = vpop.f32.mrf.mxu0
    %v1592 = vadd.f32 %v1289, %v1591
    %v1593 = vpop.f32.mrf.mxu0
    %1594 = vmatprep.mubr.f32.mxu0 0.0
    %1595 = vmatmul.mubr.f32.gmra.mxu0 %v1349
    %v1596 = vpop.f32.mrf.mxu0
    %v1597 = vadd.f32 %v1289, %v1596
    %v1598 = vpop.f32.mrf.mxu0
    %1599 = vmatprep.mubr.f32.mxu0 0.0
    %1600 = vmatmul.mubr.f32.gmra.mxu0 %v1352
    %v1601 = vpop.f32.mrf.mxu0
    %v1602 = vadd.f32 %v1289, %v1601
    %v1603 = vpop.f32.mrf.mxu0
    %1604 = vmatprep.mubr.f32.mxu0 0.0
    %1605 = vmatmul.mubr.f32.gmra.mxu0 %v1355
    %v1606 = vpop.f32.mrf.mxu0
    %v1607 = vadd.f32 %v1289, %v1606
    %v1608 = vpop.f32.mrf.mxu0
    %1609 = vmatprep.mubr.f32.mxu0 0.0
    %1610 = vmatmul.mubr.f32.gmra.mxu0 %v1358
    %v1611 = vpop.f32.mrf.mxu0
    %v1612 = vadd.f32 %v1289, %v1611
    %v1613 = vpop.f32.mrf.mxu0
    %1614 = vmatprep.mubr.f32.mxu0 0.0
    %1615 = vmatmul.mubr.f32.gmra.mxu0 %v1361
    %v1616 = vpop.f32.mrf.mxu0
    %v1617 = vadd.f32 %v1289, %v1616
    %v1618 = vpop.f32.mrf.mxu0
    %1619 = vmatprep.mubr.f32.mxu0 0.0
    %1620 = vmatmul.mubr.f32.gmra.mxu0 %v1364
    %v1621 = vpop.f32.mrf.mxu0
    %v1622 = vadd.f32 %v1289, %v1621
    %v1623 = vpop.f32.mrf.mxu0
    %1624 = vmatprep.mubr.f32.mxu0 0.0
    %1625 = vmatmul.mubr.f32.gmra.mxu0 %v1367
    %v1626 = vpop.f32.mrf.mxu0
    %v1627 = vadd.f32 %v1289, %v1626
    %v1628 = vpop.f32.mrf.mxu0
    %1629 = vmatprep.mubr.f32.mxu0 0.0
    %1630 = vmatmul.mubr.f32.gmra.mxu0 %v1370
    %v1631 = vpop.f32.mrf.mxu0
    %v1632 = vadd.f32 %v1289, %v1631
    %v1633 = vpop.f32.mrf.mxu0
    %1634 = vmatprep.mubr.f32.mxu0 0.0
    %1635 = vmatmul.mubr.f32.gmra.mxu0 %v1373
    %v1636 = vpop.f32.mrf.mxu0
    %v1637 = vadd.f32 %v1289, %v1636
    %v1638 = vpop.f32.mrf.mxu0
    %1639 = vmatprep.mubr.f32.mxu0 0.0
    %1640 = vmatmul.mubr.f32.gmra.mxu0 %v1376
    %v1641 = vpop.f32.mrf.mxu0
    %v1642 = vadd.f32 %v1289, %v1641
    %v1643 = vpop.f32.mrf.mxu0
    %1644 = vmatprep.mubr.f32.mxu0 0.0
    %1645 = vmatmul.mubr.f32.gmra.mxu0 %v1379
    %v1646 = vpop.f32.mrf.mxu0
    %v1647 = vadd.f32 %v1289, %v1646
    %v1648 = vpop.f32.mrf.mxu0
    %1649 = vmatprep.mubr.f32.mxu0 0.0
    %1650 = vmatmul.mubr.f32.gmra.mxu0 %v1382
    %v1651 = vpop.f32.mrf.mxu0
    %v1652 = vadd.f32 %v1289, %v1651
    %v1653 = vpop.f32.mrf.mxu0
    %1654 = vmatprep.mubr.f32.mxu0 0.0
    %1655 = vmatmul.mubr.f32.gmra.mxu0 %v1385
    %v1656 = vpop.f32.mrf.mxu0
    %v1657 = vadd.f32 %v1289, %v1656
    %v1658 = vpop.f32.mrf.mxu0
    %1659 = vmatprep.mubr.f32.mxu0 0.0
    %1660 = vmatmul.mubr.f32.gmra.mxu0 %v1388
    %v1661 = vpop.f32.mrf.mxu0
    %v1662 = vadd.f32 %v1289, %v1661
    %v1663 = vpop.f32.mrf.mxu0
    %1664 = vmatprep.mubr.f32.mxu0 0.0
    %1665 = vmatmul.mubr.f32.gmra.mxu0 %v1391
    %v1666 = vpop.f32.mrf.mxu0
    %v1667 = vadd.f32 %v1289, %v1666
    %v1668 = vpop.f32.mrf.mxu0
    %1669 = vmatprep.mubr.f32.mxu0 0.0
    %1670 = vmatmul.mubr.f32.gmra.mxu0 %v1394
    %v1671 = vpop.f32.mrf.mxu0
    %v1672 = vadd.f32 %v1289, %v1671
    %v1673 = vpop.f32.mrf.mxu0
    %1674 = vmatprep.mubr.f32.mxu0 0.0
    %1675 = vmatmul.mubr.f32.gmra.mxu0 %v1397
    %v1676 = vpop.f32.mrf.mxu0
    %v1677 = vadd.f32 %v1289, %v1676
    %v1678 = vpop.f32.mrf.mxu0
    %1679 = vmatprep.mubr.f32.mxu0 0.0
    %1680 = vmatmul.mubr.f32.gmra.mxu0 %v1400
    %v1681 = vpop.f32.mrf.mxu0
    %v1682 = vadd.f32 %v1289, %v1681
    %v1683 = vpop.f32.mrf.mxu0
    %1684 = vmatprep.mubr.f32.mxu0 0.0
    %1685 = vmatmul.mubr.f32.gmra.mxu0 %v1403
    %v1686 = vpop.f32.mrf.mxu0
    %v1687 = vadd.f32 %v1289, %v1686
    %v1688 = vpop.f32.mrf.mxu0
    %1689 = vmatprep.mubr.f32.mxu0 0.0
    %1690 = vmatmul.mubr.f32.gmra.mxu0 %v1406
    %v1691 = vpop.f32.mrf.mxu0
    %v1692 = vadd.f32 %v1289, %v1691
    %v1693 = vpop.f32.mrf.mxu0
    %1694 = vmatprep.mubr.f32.mxu0 0.0
    %1695 = vmatmul.mubr.f32.gmra.mxu0 %v1409
    %v1696 = vpop.f32.mrf.mxu0
    %v1697 = vadd.f32 %v1289, %v1696
    %v1698 = vpop.f32.mrf.mxu0
    %1699 = vmatprep.mubr.f32.mxu0 0.0
    %1700 = vmatmul.mubr.f32.gmra.mxu0 %v1412
    %v1701 = vpop.f32.mrf.mxu0
    %v1702 = vadd.f32 %v1289, %v1701
    %v1703 = vpop.f32.mrf.mxu0
    %1704 = vmatprep.mubr.f32.mxu0 0.0
    %1705 = vmatmul.mubr.f32.gmra.mxu0 %v1415
    %v1706 = vpop.f32.mrf.mxu0
    %v1707 = vadd.f32 %v1289, %v1706
    %v1708 = vpop.f32.mrf.mxu0
    %1709 = vmatprep.mubr.f32.mxu0 0.0
    %1710 = vmatmul.mubr.f32.gmra.mxu0 %v1418
    %v1711 = vpop.f32.mrf.mxu0
    %v1712 = vadd.f32 %v1289, %v1711
    %v1713 = vpop.f32.mrf.mxu0
    %1714 = vmatprep.mubr.f32.mxu0 0.0
    %1715 = vmatmul.mubr.f32.gmra.mxu0 %v1421
    %v1716 = vpop.f32.mrf.mxu0
    %v1717 = vadd.f32 %v1289, %v1716
    %v1718 = vpop.f32.mrf.mxu0
    %1719 = vmatprep.mubr.f32.mxu0 0.0
    %1720 = vmatmul.mubr.f32.gmra.mxu0 %v1424
    %v1721 = vpop.f32.mrf.mxu0
    %v1722 = vadd.f32 %v1289, %v1721
    %v1723 = vpop.f32.mrf.mxu0
    %1724 = vmatprep.mubr.f32.mxu0 0.0
    %1725 = vmatmul.mubr.f32.gmra.mxu0 %v1427
    %v1726 = vpop.f32.mrf.mxu0
    %v1727 = vadd.f32 %v1289, %v1726
    %v1728 = vpop.f32.mrf.mxu0
    %1729 = vmatprep.mubr.f32.mxu0 0.0
    %1730 = vmatmul.mubr.f32.gmra.mxu0 %v1430
    %v1731 = vpop.f32.mrf.mxu0
    %v1732 = vadd.f32 %v1289, %v1731
    %v1733 = vpop.f32.mrf.mxu0
    %1734 = vmatprep.mubr.f32.mxu0 0.0
    %1735 = vmatmul.mubr.f32.gmra.mxu0 %v1433
    %v1736 = vpop.f32.mrf.mxu0
    %v1737 = vadd.f32 %v1289, %v1736
    %v1738 = vpop.f32.mrf.mxu0
    %1739 = vdwg.mxu0
    %v1740 = vtanh.pop %v1502
    %v1741 = vtanh.pop %v1507
    %v1742 = vtanh.pop %v1512
    %v1743 = vtanh.pop %v1517
    %v1744 = vtanh.pop %v1522
    %v1745 = vtanh.pop %v1527
    %v1746 = vtanh.pop %v1532
    %v1747 = vtanh.pop %v1537
    %v1748 = vtanh.pop %v1542
    %v1749 = vtanh.pop %v1547
    %v1750 = vtanh.pop %v1552
    %v1751 = vtanh.pop %v1557
    %v1752 = vtanh.pop %v1562
    %v1753 = vtanh.pop %v1567
    %v1754 = vtanh.pop %v1572
    %v1755 = vtanh.pop %v1577
    %v1756 = vtanh.pop %v1582
    %v1757 = vtanh.pop %v1587
    %v1758 = vtanh.pop %v1592
    %v1759 = vtanh.pop %v1597
    %v1760 = vtanh.pop %v1602
    %v1761 = vtanh.pop %v1607
    %v1762 = vtanh.pop %v1612
    %v1763 = vtanh.pop %v1617
    %v1764 = vtanh.pop %v1622
    %v1765 = vtanh.pop %v1627
    %v1766 = vtanh.pop %v1632
    %v1767 = vtanh.pop %v1637
    %v1768 = vtanh.pop %v1642
    %v1769 = vtanh.pop %v1647
    %v1770 = vtanh.pop %v1652
    %v1771 = vtanh.pop %v1657
    %v1772 = vtanh.pop %v1662
    %v1773 = vtanh.pop %v1667
    %v1774 = vtanh.pop %v1672
    %v1775 = vtanh.pop %v1677
    %v1776 = vtanh.pop %v1682
    %v1777 = vtanh.pop %v1687
    %v1778 = vtanh.pop %v1692
    %v1779 = vtanh.pop %v1697
    %v1780 = vtanh.pop %v1702
    %v1781 = vtanh.pop %v1707
    %v1782 = vtanh.pop %v1712
    %v1783 = vtanh.pop %v1717
    %v1784 = vtanh.pop %v1722
    %v1785 = vtanh.pop %v1727
    %v1786 = vtanh.pop %v1732
    %v1787 = vtanh.pop %v1737
    %v1788 = vld [vmem:[%s6] sm:$0x1]
    %v1789 = vsel %vm782, %v1740, 0.0
    %v1790 = vsel %vm782, %v1741, 0.0
    %v1791 = vadd.f32 %v1789, %v1790
    %v1792 = vsel %vm782, %v1742, 0.0
    %v1793 = vadd.f32 %v1791, %v1792
    %v1794 = vsel %vm782, %v1743, 0.0
    %v1795 = vadd.f32 %v1793, %v1794
    %v1796 = vsel %vm782, %v1744, 0.0
    %v1797 = vadd.f32 %v1795, %v1796
    %v1798 = vsel %vm782, %v1745, 0.0
    %v1799 = vadd.f32 %v1797, %v1798
    %v1800 = vsel %vm782, %v1746, 0.0
    %v1801 = vadd.f32 %v1799, %v1800
    %v1802 = vsel %vm782, %v1747, 0.0
    %v1803 = vadd.f32 %v1801, %v1802
    %v1804 = vsel %vm782, %v1748, 0.0
    %v1805 = vadd.f32 %v1803, %v1804
    %v1806 = vsel %vm782, %v1749, 0.0
    %v1807 = vadd.f32 %v1805, %v1806
    %v1808 = vsel %vm782, %v1750, 0.0
    %v1809 = vadd.f32 %v1807, %v1808
    %v1810 = vsel %vm782, %v1751, 0.0
    %v1811 = vadd.f32 %v1809, %v1810
    %v1812 = vsel %vm782, %v1752, 0.0
    %v1813 = vadd.f32 %v1811, %v1812
    %v1814 = vsel %vm782, %v1753, 0.0
    %v1815 = vadd.f32 %v1813, %v1814
    %v1816 = vsel %vm782, %v1754, 0.0
    %v1817 = vadd.f32 %v1815, %v1816
    %v1818 = vsel %vm782, %v1755, 0.0
    %v1819 = vadd.f32 %v1817, %v1818
    %v1820 = vrot.slane %v1819, 4
    %v1821 = vadd.f32 %v1819, %v1820
    %v1822 = vrot.slane %v1821, 2
    %v1823 = vadd.f32 %v1821, %v1822
    %v1824 = vrot.slane %v1823, 1
    %v1825 = vadd.f32 %v1823, %v1824
    %v1826 = vrcp.pop 128.0
    %v1827 = vmul.f32 %v1825, %v1826
    %v1828 = vmul.f32 %v1827, %v1788
    %vm1829 = vcmask 253952
    %v1830 = vsel %vm1829, %v1828, 0.0
    %1831 = vadd.xlane.f32.xlu0 %v1830
    %v1832 = vpop.xlane.xlu0 %1831
    %v1833 = vsel %vm782, %v1756, 0.0
    %v1834 = vsel %vm782, %v1757, 0.0
    %v1835 = vadd.f32 %v1833, %v1834
    %v1836 = vsel %vm782, %v1758, 0.0
    %v1837 = vadd.f32 %v1835, %v1836
    %v1838 = vsel %vm782, %v1759, 0.0
    %v1839 = vadd.f32 %v1837, %v1838
    %v1840 = vsel %vm782, %v1760, 0.0
    %v1841 = vadd.f32 %v1839, %v1840
    %v1842 = vsel %vm782, %v1761, 0.0
    %v1843 = vadd.f32 %v1841, %v1842
    %v1844 = vsel %vm782, %v1762, 0.0
    %v1845 = vadd.f32 %v1843, %v1844
    %v1846 = vsel %vm782, %v1763, 0.0
    %v1847 = vadd.f32 %v1845, %v1846
    %v1848 = vsel %vm782, %v1764, 0.0
    %v1849 = vadd.f32 %v1847, %v1848
    %v1850 = vsel %vm782, %v1765, 0.0
    %v1851 = vadd.f32 %v1849, %v1850
    %v1852 = vsel %vm782, %v1766, 0.0
    %v1853 = vadd.f32 %v1851, %v1852
    %v1854 = vsel %vm782, %v1767, 0.0
    %v1855 = vadd.f32 %v1853, %v1854
    %v1856 = vsel %vm782, %v1768, 0.0
    %v1857 = vadd.f32 %v1855, %v1856
    %v1858 = vsel %vm782, %v1769, 0.0
    %v1859 = vadd.f32 %v1857, %v1858
    %v1860 = vsel %vm782, %v1770, 0.0
    %v1861 = vadd.f32 %v1859, %v1860
    %v1862 = vsel %vm782, %v1771, 0.0
    %v1863 = vadd.f32 %v1861, %v1862
    %v1864 = vrot.slane %v1863, 4
    %v1865 = vadd.f32 %v1863, %v1864
    %v1866 = vrot.slane %v1865, 2
    %v1867 = vadd.f32 %v1865, %v1866
    %v1868 = vrot.slane %v1867, 1
    %v1869 = vadd.f32 %v1867, %v1868
    %v1870 = vmul.f32 %v1869, %v1826
    %v1871 = vmul.f32 %v1870, %v1788
    %v1872 = vsel %vm1829, %v1871, 0.0
    %1873 = vadd.xlane.f32.xlu0 %v1872
    %v1874 = vpop.xlane.xlu0 %1873
    %v1875 = vsel %vm782, %v1772, 0.0
    %v1876 = vsel %vm782, %v1773, 0.0
    %v1877 = vadd.f32 %v1875, %v1876
    %v1878 = vsel %vm782, %v1774, 0.0
    %v1879 = vadd.f32 %v1877, %v1878
    %v1880 = vsel %vm782, %v1775, 0.0
    %v1881 = vadd.f32 %v1879, %v1880
    %v1882 = vsel %vm782, %v1776, 0.0
    %v1883 = vadd.f32 %v1881, %v1882
    %v1884 = vsel %vm782, %v1777, 0.0
    %v1885 = vadd.f32 %v1883, %v1884
    %v1886 = vsel %vm782, %v1778, 0.0
    %v1887 = vadd.f32 %v1885, %v1886
    %v1888 = vsel %vm782, %v1779, 0.0
    %v1889 = vadd.f32 %v1887, %v1888
    %v1890 = vsel %vm782, %v1780, 0.0
    %v1891 = vadd.f32 %v1889, %v1890
    %v1892 = vsel %vm782, %v1781, 0.0
    %v1893 = vadd.f32 %v1891, %v1892
    %v1894 = vsel %vm782, %v1782, 0.0
    %v1895 = vadd.f32 %v1893, %v1894
    %v1896 = vsel %vm782, %v1783, 0.0
    %v1897 = vadd.f32 %v1895, %v1896
    %v1898 = vsel %vm782, %v1784, 0.0
    %v1899 = vadd.f32 %v1897, %v1898
    %v1900 = vsel %vm782, %v1785, 0.0
    %v1901 = vadd.f32 %v1899, %v1900
    %v1902 = vsel %vm782, %v1786, 0.0
    %v1903 = vadd.f32 %v1901, %v1902
    %v1904 = vsel %vm782, %v1787, 0.0
    %v1905 = vadd.f32 %v1903, %v1904
    %v1906 = vrot.slane %v1905, 4
    %v1907 = vadd.f32 %v1905, %v1906
    %v1908 = vrot.slane %v1907, 2
    %v1909 = vadd.f32 %v1907, %v1908
    %v1910 = vrot.slane %v1909, 1
    %v1911 = vadd.f32 %v1909, %v1910
    %v1912 = vmul.f32 %v1911, %v1826
    %v1913 = vmul.f32 %v1912, %v1788
    %v1914 = vsel %vm1829, %v1913, 0.0
    %1915 = vadd.xlane.f32.xlu0 %v1914
    %v1916 = vpop.xlane.xlu0 %1915
    %v1917 = vmax.f32 %v1832, %v1874
    %v1918 = vmax.f32 %v1917, %v1916
    %v1919 = vsub.f32 %v1832, %v1918
    %v1920 = vmul.f32 %v1919, 1.442695
    %v1921 = vpow.pop %v1920
    %v1922 = vsub.f32 %v1874, %v1918
    %v1923 = vmul.f32 %v1922, 1.442695
    %v1924 = vpow.pop %v1923
    %v1925 = vsub.f32 %v1916, %v1918
    %v1926 = vmul.f32 %v1925, 1.442695
    %v1927 = vpow.pop %v1926
    %v1928 = vadd.f32 %v1921, %v1924
    %v1929 = vadd.f32 %v1928, %v1927
    %v1930 = vrcp.pop %v1929
    %1931 = vst.msk [vmem:[%s9] sm:$0xff] %vm782, %v1232
    %1932 = vst.msk [vmem:[%s9 + $0x8] sm:$0xff] %vm782, %v1233
    %1933 = vst.msk [vmem:[%s9 + $0x10] sm:$0xff] %vm782, %v1234
    %1934 = vst.msk [vmem:[%s9 + $0x18] sm:$0xff] %vm782, %v1235
    %1935 = vst.msk [vmem:[%s9 + $0x20] sm:$0xff] %vm782, %v1236
    %1936 = vst.msk [vmem:[%s9 + $0x28] sm:$0xff] %vm782, %v1237
    %1937 = vst.msk [vmem:[%s9 + $0x30] sm:$0xff] %vm782, %v1238
    %1938 = vst.msk [vmem:[%s9 + $0x38] sm:$0xff] %vm782, %v1239
    %1939 = vst.msk [vmem:[%s9 + $0x40] sm:$0xff] %vm782, %v1240
    %1940 = vst.msk [vmem:[%s9 + $0x48] sm:$0xff] %vm782, %v1241
    %1941 = vst.msk [vmem:[%s9 + $0x50] sm:$0xff] %vm782, %v1242
    %1942 = vst.msk [vmem:[%s9 + $0x58] sm:$0xff] %vm782, %v1243
    %1943 = vst.msk [vmem:[%s9 + $0x60] sm:$0xff] %vm782, %v1244
    %1944 = vst.msk [vmem:[%s9 + $0x68] sm:$0xff] %vm782, %v1245
    %1945 = vst.msk [vmem:[%s9 + $0x70] sm:$0xff] %vm782, %v1246
    %1946 = vst.msk [vmem:[%s9 + $0x78] sm:$0xff] %vm782, %v1247
    %v1947 = vmul.f32 %v1921, %v1930
    %v1948 = vlaneseq
    %v1949 = vshrl.u32 %v1948, 7
    %v1950 = vsub.s32 0, %v1949
    %v1951 = vrot.slane %v1947, %v1950
    %v1952 = vmul.f32 %v1951, %v1232
    %v1953 = vmul.f32 %v1951, %v1233
    %v1954 = vmul.f32 %v1951, %v1234
    %v1955 = vmul.f32 %v1951, %v1235
    %v1956 = vmul.f32 %v1951, %v1236
    %v1957 = vmul.f32 %v1951, %v1237
    %v1958 = vmul.f32 %v1951, %v1238
    %v1959 = vmul.f32 %v1951, %v1239
    %v1960 = vmul.f32 %v1951, %v1240
    %v1961 = vmul.f32 %v1951, %v1241
    %v1962 = vmul.f32 %v1951, %v1242
    %v1963 = vmul.f32 %v1951, %v1243
    %v1964 = vmul.f32 %v1951, %v1244
    %v1965 = vmul.f32 %v1951, %v1245
    %v1966 = vmul.f32 %v1951, %v1246
    %v1967 = vmul.f32 %v1951, %v1247
    %v1968 = vadd.f32 %v1952, 0.0
    %v1969 = vadd.f32 %v1953, 0.0
    %v1970 = vadd.f32 %v1954, 0.0
    %v1971 = vadd.f32 %v1955, 0.0
    %v1972 = vadd.f32 %v1956, 0.0
    %v1973 = vadd.f32 %v1957, 0.0
    %v1974 = vadd.f32 %v1958, 0.0
    %v1975 = vadd.f32 %v1959, 0.0
    %v1976 = vadd.f32 %v1960, 0.0
    %v1977 = vadd.f32 %v1961, 0.0
    %v1978 = vadd.f32 %v1962, 0.0
    %v1979 = vadd.f32 %v1963, 0.0
    %v1980 = vadd.f32 %v1964, 0.0
    %v1981 = vadd.f32 %v1965, 0.0
    %v1982 = vadd.f32 %v1966, 0.0
    %v1983 = vadd.f32 %v1967, 0.0
    %1984 = vrot.lane.b32.xlu0 %v1248, 32
    %v1985 = vpop.permute.xlu0 %1984
    %1986 = vrot.lane.b32.xlu0 %v1249, 32
    %v1987 = vpop.permute.xlu0 %1986
    %1988 = vrot.lane.b32.xlu0 %v1250, 32
    %v1989 = vpop.permute.xlu0 %1988
    %1990 = vrot.lane.b32.xlu0 %v1251, 32
    %v1991 = vpop.permute.xlu0 %1990
    %1992 = vrot.lane.b32.xlu0 %v1252, 32
    %v1993 = vpop.permute.xlu0 %1992
    %1994 = vrot.lane.b32.xlu0 %v1253, 32
    %v1995 = vpop.permute.xlu0 %1994
    %1996 = vrot.lane.b32.xlu0 %v1254, 32
    %v1997 = vpop.permute.xlu0 %1996
    %1998 = vrot.lane.b32.xlu0 %v1255, 32
    %v1999 = vpop.permute.xlu0 %1998
    %2000 = vrot.lane.b32.xlu0 %v1256, 32
    %v2001 = vpop.permute.xlu0 %2000
    %2002 = vrot.lane.b32.xlu0 %v1257, 32
    %v2003 = vpop.permute.xlu0 %2002
    %2004 = vrot.lane.b32.xlu0 %v1258, 32
    %v2005 = vpop.permute.xlu0 %2004
    %2006 = vrot.lane.b32.xlu0 %v1259, 32
    %v2007 = vpop.permute.xlu0 %2006
    %2008 = vrot.lane.b32.xlu0 %v1260, 32
    %v2009 = vpop.permute.xlu0 %2008
    %2010 = vrot.lane.b32.xlu0 %v1261, 32
    %v2011 = vpop.permute.xlu0 %2010
    %2012 = vrot.lane.b32.xlu0 %v1262, 32
    %v2013 = vpop.permute.xlu0 %2012
    %2014 = vrot.lane.b32.xlu0 %v1263, 32
    %v2015 = vpop.permute.xlu0 %2014
    %vm2032 = vcmask 523520
    %2033 = vst.msk [vmem:[%s9] sm:$0xff] %vm2032, %v1985
    %2034 = vst.msk [vmem:[%s9 + $0x8] sm:$0xff] %vm2032, %v1987
    %2035 = vst.msk [vmem:[%s9 + $0x10] sm:$0xff] %vm2032, %v1989
    %2036 = vst.msk [vmem:[%s9 + $0x18] sm:$0xff] %vm2032, %v1991
    %2037 = vst.msk [vmem:[%s9 + $0x20] sm:$0xff] %vm2032, %v1993
    %2038 = vst.msk [vmem:[%s9 + $0x28] sm:$0xff] %vm2032, %v1995
    %2039 = vst.msk [vmem:[%s9 + $0x30] sm:$0xff] %vm2032, %v1997
    %2040 = vst.msk [vmem:[%s9 + $0x38] sm:$0xff] %vm2032, %v1999
    %2041 = vst.msk [vmem:[%s9 + $0x40] sm:$0xff] %vm2032, %v2001
    %2042 = vst.msk [vmem:[%s9 + $0x48] sm:$0xff] %vm2032, %v2003
    %2043 = vst.msk [vmem:[%s9 + $0x50] sm:$0xff] %vm2032, %v2005
    %2044 = vst.msk [vmem:[%s9 + $0x58] sm:$0xff] %vm2032, %v2007
    %2045 = vst.msk [vmem:[%s9 + $0x60] sm:$0xff] %vm2032, %v2009
    %2046 = vst.msk [vmem:[%s9 + $0x68] sm:$0xff] %vm2032, %v2011
    %2047 = vst.msk [vmem:[%s9 + $0x70] sm:$0xff] %vm2032, %v2013
    %2048 = vst.msk [vmem:[%s9 + $0x78] sm:$0xff] %vm2032, %v2015
    %v2049 = vmul.f32 %v1924, %v1930
    %v2050 = vlaneseq
    %v2051 = vshrl.u32 %v2050, 7
    %v2052 = vsub.s32 0, %v2051
    %v2053 = vrot.slane %v2049, %v2052
    %v2054 = vmul.f32 %v2053, %v1248
    %v2055 = vmul.f32 %v2053, %v1249
    %v2056 = vmul.f32 %v2053, %v1250
    %v2057 = vmul.f32 %v2053, %v1251
    %v2058 = vmul.f32 %v2053, %v1252
    %v2059 = vmul.f32 %v2053, %v1253
    %v2060 = vmul.f32 %v2053, %v1254
    %v2061 = vmul.f32 %v2053, %v1255
    %v2062 = vmul.f32 %v2053, %v1256
    %v2063 = vmul.f32 %v2053, %v1257
    %v2064 = vmul.f32 %v2053, %v1258
    %v2065 = vmul.f32 %v2053, %v1259
    %v2066 = vmul.f32 %v2053, %v1260
    %v2067 = vmul.f32 %v2053, %v1261
    %v2068 = vmul.f32 %v2053, %v1262
    %v2069 = vmul.f32 %v2053, %v1263
    %v2070 = vadd.f32 %v1968, %v2054
    %v2071 = vadd.f32 %v1969, %v2055
    %v2072 = vadd.f32 %v1970, %v2056
    %v2073 = vadd.f32 %v1971, %v2057
    %v2074 = vadd.f32 %v1972, %v2058
    %v2075 = vadd.f32 %v1973, %v2059
    %v2076 = vadd.f32 %v1974, %v2060
    %v2077 = vadd.f32 %v1975, %v2061
    %v2078 = vadd.f32 %v1976, %v2062
    %v2079 = vadd.f32 %v1977, %v2063
    %v2080 = vadd.f32 %v1978, %v2064
    %v2081 = vadd.f32 %v1979, %v2065
    %v2082 = vadd.f32 %v1980, %v2066
    %v2083 = vadd.f32 %v1981, %v2067
    %v2084 = vadd.f32 %v1982, %v2068
    %v2085 = vadd.f32 %v1983, %v2069
    %2086 = vrot.lane.b32.xlu0 %v1264, 64
    %v2087 = vpop.permute.xlu0 %2086
    %2088 = vrot.lane.b32.xlu0 %v1265, 64
    %v2089 = vpop.permute.xlu0 %2088
    %2090 = vrot.lane.b32.xlu0 %v1266, 64
    %v2091 = vpop.permute.xlu0 %2090
    %2092 = vrot.lane.b32.xlu0 %v1267, 64
    %v2093 = vpop.permute.xlu0 %2092
    %2094 = vrot.lane.b32.xlu0 %v1268, 64
    %v2095 = vpop.permute.xlu0 %2094
    %2096 = vrot.lane.b32.xlu0 %v1269, 64
    %v2097 = vpop.permute.xlu0 %2096
    %2098 = vrot.lane.b32.xlu0 %v1270, 64
    %v2099 = vpop.permute.xlu0 %2098
    %2100 = vrot.lane.b32.xlu0 %v1271, 64
    %v2101 = vpop.permute.xlu0 %2100
    %2102 = vrot.lane.b32.xlu0 %v1272, 64
    %v2103 = vpop.permute.xlu0 %2102
    %2104 = vrot.lane.b32.xlu0 %v1273, 64
    %v2105 = vpop.permute.xlu0 %2104
    %2106 = vrot.lane.b32.xlu0 %v1274, 64
    %v2107 = vpop.permute.xlu0 %2106
    %2108 = vrot.lane.b32.xlu0 %v1275, 64
    %v2109 = vpop.permute.xlu0 %2108
    %2110 = vrot.lane.b32.xlu0 %v1276, 64
    %v2111 = vpop.permute.xlu0 %2110
    %2112 = vrot.lane.b32.xlu0 %v1277, 64
    %v2113 = vpop.permute.xlu0 %2112
    %2114 = vrot.lane.b32.xlu0 %v1278, 64
    %v2115 = vpop.permute.xlu0 %2114
    %2116 = vrot.lane.b32.xlu0 %v1279, 64
    %v2117 = vpop.permute.xlu0 %2116
    %vm2134 = vcmask 785920
    %2135 = vst.msk [vmem:[%s9] sm:$0xff] %vm2134, %v2087
    %2136 = vst.msk [vmem:[%s9 + $0x8] sm:$0xff] %vm2134, %v2089
    %2137 = vst.msk [vmem:[%s9 + $0x10] sm:$0xff] %vm2134, %v2091
    %2138 = vst.msk [vmem:[%s9 + $0x18] sm:$0xff] %vm2134, %v2093
    %2139 = vst.msk [vmem:[%s9 + $0x20] sm:$0xff] %vm2134, %v2095
    %2140 = vst.msk [vmem:[%s9 + $0x28] sm:$0xff] %vm2134, %v2097
    %2141 = vst.msk [vmem:[%s9 + $0x30] sm:$0xff] %vm2134, %v2099
    %2142 = vst.msk [vmem:[%s9 + $0x38] sm:$0xff] %vm2134, %v2101
    %2143 = vst.msk [vmem:[%s9 + $0x40] sm:$0xff] %vm2134, %v2103
    %2144 = vst.msk [vmem:[%s9 + $0x48] sm:$0xff] %vm2134, %v2105
    %2145 = vst.msk [vmem:[%s9 + $0x50] sm:$0xff] %vm2134, %v2107
    %2146 = vst.msk [vmem:[%s9 + $0x58] sm:$0xff] %vm2134, %v2109
    %2147 = vst.msk [vmem:[%s9 + $0x60] sm:$0xff] %vm2134, %v2111
    %2148 = vst.msk [vmem:[%s9 + $0x68] sm:$0xff] %vm2134, %v2113
    %2149 = vst.msk [vmem:[%s9 + $0x70] sm:$0xff] %vm2134, %v2115
    %2150 = vst.msk [vmem:[%s9 + $0x78] sm:$0xff] %vm2134, %v2117
    %v2151 = vmul.f32 %v1927, %v1930
    %v2152 = vlaneseq
    %v2153 = vshrl.u32 %v2152, 7
    %v2154 = vsub.s32 0, %v2153
    %v2155 = vrot.slane %v2151, %v2154
    %v2156 = vmul.f32 %v2155, %v1264
    %v2157 = vmul.f32 %v2155, %v1265
    %v2158 = vmul.f32 %v2155, %v1266
    %v2159 = vmul.f32 %v2155, %v1267
    %v2160 = vmul.f32 %v2155, %v1268
    %v2161 = vmul.f32 %v2155, %v1269
    %v2162 = vmul.f32 %v2155, %v1270
    %v2163 = vmul.f32 %v2155, %v1271
    %v2164 = vmul.f32 %v2155, %v1272
    %v2165 = vmul.f32 %v2155, %v1273
    %v2166 = vmul.f32 %v2155, %v1274
    %v2167 = vmul.f32 %v2155, %v1275
    %v2168 = vmul.f32 %v2155, %v1276
    %v2169 = vmul.f32 %v2155, %v1277
    %v2170 = vmul.f32 %v2155, %v1278
    %v2171 = vmul.f32 %v2155, %v1279
    %v2172 = vadd.f32 %v2070, %v2156
    %v2173 = vadd.f32 %v2071, %v2157
    %v2174 = vadd.f32 %v2072, %v2158
    %v2175 = vadd.f32 %v2073, %v2159
    %v2176 = vadd.f32 %v2074, %v2160
    %v2177 = vadd.f32 %v2075, %v2161
    %v2178 = vadd.f32 %v2076, %v2162
    %v2179 = vadd.f32 %v2077, %v2163
    %v2180 = vadd.f32 %v2078, %v2164
    %v2181 = vadd.f32 %v2079, %v2165
    %v2182 = vadd.f32 %v2080, %v2166
    %v2183 = vadd.f32 %v2081, %v2167
    %v2184 = vadd.f32 %v2082, %v2168
    %v2185 = vadd.f32 %v2083, %v2169
    %v2186 = vadd.f32 %v2084, %v2170
    %v2187 = vadd.f32 %v2085, %v2171
    %v2188 = vld [vmem:[%s7] sm:$0xff]
    %v2189 = vld [vmem:[%s7 + $0x8] sm:$0xff]
    %v2190 = vld [vmem:[%s7 + $0x10] sm:$0xff]
    %v2191 = vld [vmem:[%s7 + $0x18] sm:$0xff]
    %v2193 = vsel %vm782, %v2172, 0
    %v2196 = vsel %vm782, %v2173, 0
    %v2199 = vsel %vm782, %v2174, 0
    %v2202 = vsel %vm782, %v2175, 0
    %v2205 = vsel %vm782, %v2176, 0
    %v2208 = vsel %vm782, %v2177, 0
    %v2211 = vsel %vm782, %v2178, 0
    %v2214 = vsel %vm782, %v2179, 0
    %v2217 = vsel %vm782, %v2180, 0
    %v2220 = vsel %vm782, %v2181, 0
    %v2223 = vsel %vm782, %v2182, 0
    %v2226 = vsel %vm782, %v2183, 0
    %v2229 = vsel %vm782, %v2184, 0
    %v2232 = vsel %vm782, %v2185, 0
    %v2235 = vsel %vm782, %v2186, 0
    %v2238 = vsel %vm782, %v2187, 0
    %2240 = vmatprep.subr.mxu0 0.0
    %2241 = vmatpush1.msra.mxu0 0.0
    %2242 = vmatprep.subr.mxu0 0.0
    %2243 = vmatpush1.msra.mxu0 0.0
    %2244 = vmatprep.subr.mxu0 0.0
    %2245 = vmatpush1.msra.mxu0 0.0
    %2246 = vmatprep.subr.mxu0 0.0
    %2247 = vmatpush1.msra.mxu0 0.0
    %2248 = vmatprep.subr.mxu0 0.0
    %2249 = vmatpush1.msra.mxu0 0.0
    %2250 = vmatprep.subr.mxu0 0.0
    %2251 = vmatpush1.msra.mxu0 0.0
    %2252 = vmatprep.subr.mxu0 0.0
    %2253 = vmatpush1.msra.mxu0 0.0
    %2254 = vmatprep.subr.mxu0 0.0
    %2255 = vmatpush1.msra.mxu0 0.0
    %2256 = vmatprep.subr.mxu0 0.0
    %2257 = vmatpush1.msra.mxu0 0.0
    %2258 = vmatprep.subr.mxu0 0.0
    %2259 = vmatpush1.msra.mxu0 0.0
    %2260 = vmatprep.subr.mxu0 0.0
    %2261 = vmatpush1.msra.mxu0 0.0
    %2262 = vmatprep.subr.mxu0 0.0
    %2263 = vmatpush1.msra.mxu0 0.0
    %2264 = vmatprep.subr.mxu0 0.0
    %2265 = vmatpush1.msra.mxu0 %v2191
    %2266 = vmatprep.subr.mxu0 0.0
    %2267 = vmatpush1.msra.mxu0 %v2190
    %2268 = vmatprep.subr.mxu0 0.0
    %2269 = vmatpush1.msra.mxu0 %v2189
    %2270 = vmatprep.subr.mxu0 0.0
    %2271 = vmatpush1.msra.mxu0 %v2188
    %2272 = vmatprep.subr.mxu0 0.0
    %2273 = vmatpush2.msra.mxu0 0.0
    %2274 = vmatprep.subr.mxu0 0.0
    %2275 = vmatpush2.msra.mxu0 0.0
    %2276 = vmatprep.subr.mxu0 0.0
    %2277 = vmatpush2.msra.mxu0 0.0
    %2278 = vmatprep.subr.mxu0 0.0
    %2279 = vmatpush2.msra.mxu0 0.0
    %2280 = vmatprep.subr.mxu0 0.0
    %2281 = vmatpush2.msra.mxu0 0.0
    %2282 = vmatprep.subr.mxu0 0.0
    %2283 = vmatpush2.msra.mxu0 0.0
    %2284 = vmatprep.subr.mxu0 0.0
    %2285 = vmatpush2.msra.mxu0 0.0
    %2286 = vmatprep.subr.mxu0 0.0
    %2287 = vmatpush2.msra.mxu0 0.0
    %2288 = vmatprep.subr.mxu0 0.0
    %2289 = vmatpush2.msra.mxu0 0.0
    %2290 = vmatprep.subr.mxu0 0.0
    %2291 = vmatpush2.msra.mxu0 0.0
    %2292 = vmatprep.subr.mxu0 0.0
    %2293 = vmatpush2.msra.mxu0 0.0
    %2294 = vmatprep.subr.mxu0 0.0
    %2295 = vmatpush2.msra.mxu0 0.0
    %2296 = vmatprep.subr.mxu0 0.0
    %2297 = vmatpush2.msra.mxu0 0.0
    %2298 = vmatprep.subr.mxu0 0.0
    %2299 = vmatpush2.msra.mxu0 0.0
    %2300 = vmatprep.subr.mxu0 0.0
    %2301 = vmatpush2.msra.mxu0 0.0
    %2302 = vmatprep.subr.mxu0 0.0
    %2303 = vmatpush2.msra.mxu0 0.0
    %2304 = vmatprep.mubr.f32.mxu0 0.0
    %2305 = vmatmul.mubr.f32.gmra.mxu0 %v2193
    %v2306 = vpop.f32.mrf.mxu0
    %v2307 = vadd.f32 0.0, %v2306
    %v2308 = vpop.f32.mrf.mxu0
    %2309 = vmatprep.mubr.f32.mxu0 0.0
    %2310 = vmatmul.mubr.f32.gmra.mxu0 %v2196
    %v2311 = vpop.f32.mrf.mxu0
    %v2312 = vadd.f32 0.0, %v2311
    %v2313 = vpop.f32.mrf.mxu0
    %2314 = vmatprep.mubr.f32.mxu0 0.0
    %2315 = vmatmul.mubr.f32.gmra.mxu0 %v2199
    %v2316 = vpop.f32.mrf.mxu0
    %v2317 = vadd.f32 0.0, %v2316
    %v2318 = vpop.f32.mrf.mxu0
    %2319 = vmatprep.mubr.f32.mxu0 0.0
    %2320 = vmatmul.mubr.f32.gmra.mxu0 %v2202
    %v2321 = vpop.f32.mrf.mxu0
    %v2322 = vadd.f32 0.0, %v2321
    %v2323 = vpop.f32.mrf.mxu0
    %2324 = vmatprep.mubr.f32.mxu0 0.0
    %2325 = vmatmul.mubr.f32.gmra.mxu0 %v2205
    %v2326 = vpop.f32.mrf.mxu0
    %v2327 = vadd.f32 0.0, %v2326
    %v2328 = vpop.f32.mrf.mxu0
    %2329 = vmatprep.mubr.f32.mxu0 0.0
    %2330 = vmatmul.mubr.f32.gmra.mxu0 %v2208
    %v2331 = vpop.f32.mrf.mxu0
    %v2332 = vadd.f32 0.0, %v2331
    %v2333 = vpop.f32.mrf.mxu0
    %2334 = vmatprep.mubr.f32.mxu0 0.0
    %2335 = vmatmul.mubr.f32.gmra.mxu0 %v2211
    %v2336 = vpop.f32.mrf.mxu0
    %v2337 = vadd.f32 0.0, %v2336
    %v2338 = vpop.f32.mrf.mxu0
    %2339 = vmatprep.mubr.f32.mxu0 0.0
    %2340 = vmatmul.mubr.f32.gmra.mxu0 %v2214
    %v2341 = vpop.f32.mrf.mxu0
    %v2342 = vadd.f32 0.0, %v2341
    %v2343 = vpop.f32.mrf.mxu0
    %2344 = vmatprep.mubr.f32.mxu0 0.0
    %2345 = vmatmul.mubr.f32.gmra.mxu0 %v2217
    %v2346 = vpop.f32.mrf.mxu0
    %v2347 = vadd.f32 0.0, %v2346
    %v2348 = vpop.f32.mrf.mxu0
    %2349 = vmatprep.mubr.f32.mxu0 0.0
    %2350 = vmatmul.mubr.f32.gmra.mxu0 %v2220
    %v2351 = vpop.f32.mrf.mxu0
    %v2352 = vadd.f32 0.0, %v2351
    %v2353 = vpop.f32.mrf.mxu0
    %2354 = vmatprep.mubr.f32.mxu0 0.0
    %2355 = vmatmul.mubr.f32.gmra.mxu0 %v2223
    %v2356 = vpop.f32.mrf.mxu0
    %v2357 = vadd.f32 0.0, %v2356
    %v2358 = vpop.f32.mrf.mxu0
    %2359 = vmatprep.mubr.f32.mxu0 0.0
    %2360 = vmatmul.mubr.f32.gmra.mxu0 %v2226
    %v2361 = vpop.f32.mrf.mxu0
    %v2362 = vadd.f32 0.0, %v2361
    %v2363 = vpop.f32.mrf.mxu0
    %2364 = vmatprep.mubr.f32.mxu0 0.0
    %2365 = vmatmul.mubr.f32.gmra.mxu0 %v2229
    %v2366 = vpop.f32.mrf.mxu0
    %v2367 = vadd.f32 0.0, %v2366
    %v2368 = vpop.f32.mrf.mxu0
    %2369 = vmatprep.mubr.f32.mxu0 0.0
    %2370 = vmatmul.mubr.f32.gmra.mxu0 %v2232
    %v2371 = vpop.f32.mrf.mxu0
    %v2372 = vadd.f32 0.0, %v2371
    %v2373 = vpop.f32.mrf.mxu0
    %2374 = vmatprep.mubr.f32.mxu0 0.0
    %2375 = vmatmul.mubr.f32.gmra.mxu0 %v2235
    %v2376 = vpop.f32.mrf.mxu0
    %v2377 = vadd.f32 0.0, %v2376
    %v2378 = vpop.f32.mrf.mxu0
    %2379 = vmatprep.mubr.f32.mxu0 0.0
    %2380 = vmatmul.mubr.f32.gmra.mxu0 %v2238
    %v2381 = vpop.f32.mrf.mxu0
    %v2382 = vadd.f32 0.0, %v2381
    %v2383 = vpop.f32.mrf.mxu0
    %2384 = vdwg.mxu0
    %vm2385 = vcmask 64512
    %2386 = vst.msk [vmem:[%s8] sm:$0xff] %vm2385, %v2307
    %2387 = vst.msk [vmem:[%s8 + $0x8] sm:$0xff] %vm2385, %v2312
    %2388 = vst.msk [vmem:[%s8 + $0x10] sm:$0xff] %vm2385, %v2317
    %2389 = vst.msk [vmem:[%s8 + $0x18] sm:$0xff] %vm2385, %v2322
    %2390 = vst.msk [vmem:[%s8 + $0x20] sm:$0xff] %vm2385, %v2327
    %2391 = vst.msk [vmem:[%s8 + $0x28] sm:$0xff] %vm2385, %v2332
    %2392 = vst.msk [vmem:[%s8 + $0x30] sm:$0xff] %vm2385, %v2337
    %2393 = vst.msk [vmem:[%s8 + $0x38] sm:$0xff] %vm2385, %v2342
    %2394 = vst.msk [vmem:[%s8 + $0x40] sm:$0xff] %vm2385, %v2347
    %2395 = vst.msk [vmem:[%s8 + $0x48] sm:$0xff] %vm2385, %v2352
    %2396 = vst.msk [vmem:[%s8 + $0x50] sm:$0xff] %vm2385, %v2357
    %2397 = vst.msk [vmem:[%s8 + $0x58] sm:$0xff] %vm2385, %v2362
    %2398 = vst.msk [vmem:[%s8 + $0x60] sm:$0xff] %vm2385, %v2367
    %2399 = vst.msk [vmem:[%s8 + $0x68] sm:$0xff] %vm2385, %v2372
    %2400 = vst.msk [vmem:[%s8 + $0x70] sm:$0xff] %vm2385, %v2377
    %2401 = vst.msk [vmem:[%s8 + $0x78] sm:$0xff] %vm2385, %v2382
    // Predicated region
    $region38: #{han_forward.1} parent=1 // pred_check
      _
    $region39: #{han_forward.1} parent=1 // pred_check_branch
      %2403 = sbr.rel (0) target = $region41
    $region40: #{han_forward.1} parent=1 // pred_region
      _
    $region41: #{han_forward.1} parent=1 // pred_fallthru
      _
    // Predicated region
    $region42: #{han_forward.1} parent=1 // pred_check
      _
    $region43: #{han_forward.1} parent=1 // pred_check_branch
      %2405 = sbr.rel (0) target = $region45
    $region44: #{han_forward.1} parent=1 // pred_region
      _
    $region45: #{han_forward.1} parent=1 // pred_fallthru
      _
    // Predicated region
    $region46: #{han_forward.1} parent=1 // pred_check
      _
    $region47: #{han_forward.1} parent=1 // pred_check_branch
      %2407 = sbr.rel (0) target = $region49
    $region48: #{han_forward.1} parent=1 // pred_region
      _
    $region49: #{han_forward.1} parent=1 // pred_fallthru
      _
    // Predicated region
    $region50: #{han_forward.1} parent=1 // pred_check
      _
    $region51: #{han_forward.1} parent=1 // pred_check_branch
      %2409 = sbr.rel (0) target = $region53
    $region52: #{han_forward.1} parent=1 // pred_region
      _
    $region53: #{han_forward.1} parent=1 // pred_fallthru
      _
    %2410 = vsyncpa [#allocation3], 1

</llo_original>
